<compile_context>
chip_gen: v7x
topology: tpu7x:2x2x1
jax: 0.10.0
libtpu: 0.0.40
codegen_flags: <defaults>
</compile_context>

<pallas_src>
import functools

import jax
import jax.numpy as jnp
from jax.experimental import pallas as pl
from jax.experimental.pallas import tpu as pltpu


def _vanilla_rnn_kernel(x_ref, wih_ref, whh_ref, b_ref, wout_ref, bout_ref,
                        out_ref, *, T, Bp, H):
    """Whole forward pass in a single (gridless) kernel invocation.

    x_ref:    (T*Bp, D_in)   time-major input, batch padded to Bp (sublanes)
    wih_ref:  (D_in, 4H)     W_ih^T, g-gate columns pre-scaled by 2
    whh_ref:  (H, 4H)        W_hh^T, g-gate columns pre-scaled by 2
    b_ref:    (1, 4H)        b_ih + b_hh (folded), g-gate slice pre-scaled by 2
    wout_ref: (H, Dp_out)    W_out^T, zero-padded on the lane dim
    bout_ref: (1, Dp_out)    b_out, zero-padded
    out_ref:  (T*Bp, Dp_out) lane/sublane-dense output
    """
    # (1) Input projection for ALL time steps in one batched MXU matmul;
    #     the folded-bias broadcast is hoisted out of the recurrence.
    xg = (jnp.dot(x_ref[...], wih_ref[...],
                  preferred_element_type=jnp.float32)
          + b_ref[...])                                    # (T*Bp, 4H)

    whh = whh_ref[...]                                     # (H, 4H), loaded once
    wout = wout_ref[...]                                   # (H, Dp_out), once
    bout = bout_ref[...]                                   # (1, Dp_out), once
    h = jnp.zeros((Bp, H), jnp.float32)                    # h0 = 0
    c = jnp.zeros((Bp, H), jnp.float32)                    # c0 = 0

    # (2) Recurrence, fully unrolled (T is a small static constant). Only the
    #     (Bp,H)x(H,4H) matmul, one full-vreg sigmoid and a (Bp,H) tanh remain
    #     on the serial critical path; the output Linear + store per step do
    #     not feed back and overlap with the next step.
    for t in range(T):
        gates = xg[t * Bp:(t + 1) * Bp, :] + jnp.dot(
            h, whh, preferred_element_type=jnp.float32)    # (Bp, 4H)
        # Single full-vreg EUP sigmoid; g-gate pre-activations were pre-scaled
        # by 2, so tanh(g) == 2*sigmoid(2g) - 1 (quarter-vreg VPU fma).
        sig = jax.nn.sigmoid(gates)
        i_g = sig[:, 0 * H:1 * H]
        f_g = sig[:, 1 * H:2 * H]
        g_g = 2.0 * sig[:, 2 * H:3 * H] - 1.0
        o_g = sig[:, 3 * H:4 * H]
        c = f_g * c + i_g * g_g
        h = o_g * jnp.tanh(c)
        # Fused output Linear + one unmasked (8,128) dense store per step.
        out_ref[t * Bp:(t + 1) * Bp, :] = (
            jnp.dot(h, wout, preferred_element_type=jnp.float32) + bout
        ).astype(out_ref.dtype)


@jax.jit
def vanilla_rnn_forward(x, params):
    """x: (T, B, input_size) float32 -> (T, B, output_dim) float32."""
    T, B, D_in = x.shape
    w_ih, w_hh, b_ih, b_hh, w_out, b_out = (
        params["w_ih"], params["w_hh"], params["b_ih"], params["b_hh"],
        params["w_out"], params["b_out"])
    H = w_hh.shape[1]
    D_out = w_out.shape[0]

    # Pad batch to the sublane width (8) and the output feature dim to the
    # lane width (128) so every vector op / store in the kernel is dense.
    Bp = max(8, -(-B // 8) * 8)
    Dp_out = max(128, -(-D_out // 128) * 128)

    x2d = (jnp.zeros((T, Bp, D_in), jnp.float32)
           .at[:, :B, :].set(x.astype(jnp.float32))
           .reshape(T * Bp, D_in))

    # Pre-scale the g-gate block (PyTorch gate order i,f,g,o -> rows 2H:3H of
    # W_ih / W_hh / biases) by 2 so the kernel can use tanh(x) = 2*sigmoid(2x)-1
    # and skip the full-vreg tanh pass.
    g_scale = (jnp.ones((4 * H,), jnp.float32)
               .at[2 * H:3 * H].set(2.0))
    wih_t = jnp.asarray(w_ih.T, jnp.float32) * g_scale[None, :]     # (D_in, 4H)
    whh_t = jnp.asarray(w_hh.T, jnp.float32) * g_scale[None, :]     # (H, 4H)
    b = (jnp.asarray(b_ih + b_hh, jnp.float32) * g_scale)[None, :]  # (1, 4H)

    wout_pad = (jnp.zeros((H, Dp_out), jnp.float32)
                .at[:, :D_out].set(w_out.T.astype(jnp.float32)))
    bout_pad = (jnp.zeros((1, Dp_out), jnp.float32)
                .at[:, :D_out].set(b_out.astype(jnp.float32)))

    kernel = functools.partial(_vanilla_rnn_kernel, T=T, Bp=Bp, H=H)

    out2d = pl.pallas_call(
        kernel,
        out_shape=jax.ShapeDtypeStruct((T * Bp, Dp_out), jnp.float32),
        in_specs=[pl.BlockSpec(memory_space=pltpu.MemorySpace.VMEM)
                  for _ in range(6)],
        out_specs=pl.BlockSpec(memory_space=pltpu.MemorySpace.VMEM),
    )(x2d, wih_t, whh_t, b, wout_pad, bout_pad)

    # Drop batch / lane padding (fused into the same jit).
    return out2d.reshape(T, Bp, Dp_out)[:, :B, :D_out]


def _reference_forward(x, params):
    """Pure-JAX reference matching PyTorch LSTM + Linear semantics."""
    w_ih, w_hh = params["w_ih"], params["w_hh"]
    b_ih, b_hh = params["b_ih"], params["b_hh"]
    w_out, b_out = params["w_out"], params["b_out"]
    H = w_hh.shape[1]
    B = x.shape[1]
    h0 = jnp.zeros((B, H), jnp.float32)
    c0 = jnp.zeros((B, H), jnp.float32)

    def step(carry, x_t):
        h, c = carry
        gates = x_t @ w_ih.T + b_ih + h @ w_hh.T + b_hh
        i, f, g, o = jnp.split(gates, 4, axis=-1)
        i, f, o = jax.nn.sigmoid(i), jax.nn.sigmoid(f), jax.nn.sigmoid(o)
        g = jnp.tanh(g)
        c = f * c + i * g
        h = o * jnp.tanh(c)
        return (h, c), h

    _, hs = jax.lax.scan(step, (h0, c0), x)
    return hs @ w_out.T + b_out


def init_params(key, input_size, hidden_dim, output_dim):
    """Deterministic init mimicking PyTorch's uniform(-1/sqrt(H), 1/sqrt(H))."""
    ks = jax.random.split(key, 6)
    k_lstm = 1.0 / jnp.sqrt(hidden_dim)
    k_lin = 1.0 / jnp.sqrt(hidden_dim)
    u = lambda k, shape, s: jax.random.uniform(k, shape, jnp.float32, -s, s)
    return {
        "w_ih": u(ks[0], (4 * hidden_dim, input_size), k_lstm),
        "w_hh": u(ks[1], (4 * hidden_dim, hidden_dim), k_lstm),
        "b_ih": u(ks[2], (4 * hidden_dim,), k_lstm),
        "b_hh": u(ks[3], (4 * hidden_dim,), k_lstm),
        "w_out": u(ks[4], (output_dim, hidden_dim), k_lin),
        "b_out": u(ks[5], (output_dim,), k_lin),
    }


if __name__ == "__main__":
    # Module config: VanillaRNN(seq_length=8, input_dim=1, hidden_dim=32,
    #                           output_dim=10, batch_size=2)
    # nn.LSTM(seq_length, hidden_dim, 1) -> LSTM input feature size == seq_length.
    seq_length = 8          # LSTM input_size
    hidden_dim = 32
    output_dim = 10
    batch_size = 2
    T = 8                   # number of time steps fed to the LSTM

    key = jax.random.PRNGKey(0)
    k_x, k_p = jax.random.split(key)
    x = jax.random.normal(k_x, (T, batch_size, seq_length), jnp.float32)
    params = init_params(k_p, seq_length, hidden_dim, output_dim)

    out = vanilla_rnn_forward(x, params)
    out = jax.block_until_ready(out)

    ref = jax.block_until_ready(_reference_forward(x, params))
    assert out.shape == (T, batch_size, output_dim)
    assert jnp.allclose(out, ref, atol=1e-5, rtol=1e-5), \
        f"max abs err {jnp.max(jnp.abs(out - ref))}"

    print("KERNEL_OK")
</pallas_src>

<mosaic_0001>
module attributes {stable_mosaic.version = 11 : i64} {
  func.func @_vanilla_rnn_kernel(%arg0: memref<64x8xf32, #tpu.memory_space<vmem>>, %arg1: memref<8x128xf32, #tpu.memory_space<vmem>>, %arg2: memref<32x128xf32, #tpu.memory_space<vmem>>, %arg3: memref<1x128xf32, #tpu.memory_space<vmem>>, %arg4: memref<32x128xf32, #tpu.memory_space<vmem>>, %arg5: memref<1x128xf32, #tpu.memory_space<vmem>>, %arg6: memref<64x128xf32, #tpu.memory_space<vmem>>) attributes {dimension_semantics = [], scalar_prefetch = 0 : i64, scratch_operands = 0 : i64, tpu.core_type = #tpu.core_type<tc>} {
    %c0 = arith.constant 0 : index
    %c0_0 = arith.constant 0 : index
    %0 = vector.load %arg0[%c0, %c0_0] : memref<64x8xf32, #tpu.memory_space<vmem>>, vector<64x8xf32>
    %c0_1 = arith.constant 0 : index
    %c0_2 = arith.constant 0 : index
    %1 = vector.load %arg1[%c0_1, %c0_2] : memref<8x128xf32, #tpu.memory_space<vmem>>, vector<8x128xf32>
    %cst = arith.constant dense<0.000000e+00> : vector<64x128xf32>
    %2 = tpu.matmul %0, %1, %cst {dimension_numbers = #tpu.dot_dimension_numbers<[1], [0], [0], [1], [0, 0, 1, 1], [], []>} : vector<64x8xf32>, vector<8x128xf32>, vector<64x128xf32> -> vector<64x128xf32>
    %c0_3 = arith.constant 0 : index
    %c0_4 = arith.constant 0 : index
    %3 = vector.load %arg3[%c0_3, %c0_4] : memref<1x128xf32, #tpu.memory_space<vmem>>, vector<1x128xf32>
    %4 = vector.broadcast %3 : vector<1x128xf32> to vector<64x128xf32>
    %5 = arith.addf %2, %4 : vector<64x128xf32>
    %c0_5 = arith.constant 0 : index
    %c0_6 = arith.constant 0 : index
    %6 = vector.load %arg2[%c0_5, %c0_6] : memref<32x128xf32, #tpu.memory_space<vmem>>, vector<32x128xf32>
    %c0_7 = arith.constant 0 : index
    %c0_8 = arith.constant 0 : index
    %7 = vector.load %arg4[%c0_7, %c0_8] : memref<32x128xf32, #tpu.memory_space<vmem>>, vector<32x128xf32>
    %c0_9 = arith.constant 0 : index
    %c0_10 = arith.constant 0 : index
    %8 = vector.load %arg5[%c0_9, %c0_10] : memref<1x128xf32, #tpu.memory_space<vmem>>, vector<1x128xf32>
    %cst_11 = arith.constant 0.000000e+00 : f32
    %9 = vector.broadcast %cst_11 : f32 to vector<8x32xf32>
    %cst_12 = arith.constant 0.000000e+00 : f32
    %10 = vector.broadcast %cst_12 : f32 to vector<8x32xf32>
    %11 = vector.extract_strided_slice %5 {offsets = [0, 0], sizes = [8, 128], strides = [1, 1]} : vector<64x128xf32> to vector<8x128xf32>
    %cst_13 = arith.constant dense<0.000000e+00> : vector<8x128xf32>
    %12 = tpu.matmul %9, %6, %cst_13 {dimension_numbers = #tpu.dot_dimension_numbers<[1], [0], [0], [1], [0, 0, 1, 1], [], []>} : vector<8x32xf32>, vector<32x128xf32>, vector<8x128xf32> -> vector<8x128xf32>
    %13 = arith.addf %11, %12 : vector<8x128xf32>
    %14 = arith.negf %13 : vector<8x128xf32>
    %15 = math.exp %14 : vector<8x128xf32>
    %cst_14 = arith.constant 1.000000e+00 : f32
    %16 = vector.broadcast %cst_14 : f32 to vector<8x128xf32>
    %17 = arith.addf %16, %15 : vector<8x128xf32>
    %18 = arith.divf %16, %17 : vector<8x128xf32>
    %19 = vector.extract_strided_slice %18 {offsets = [0, 0], sizes = [8, 32], strides = [1, 1]} : vector<8x128xf32> to vector<8x32xf32>
    %20 = vector.extract_strided_slice %18 {offsets = [0, 32], sizes = [8, 32], strides = [1, 1]} : vector<8x128xf32> to vector<8x32xf32>
    %21 = vector.extract_strided_slice %18 {offsets = [0, 64], sizes = [8, 32], strides = [1, 1]} : vector<8x128xf32> to vector<8x32xf32>
    %cst_15 = arith.constant 2.000000e+00 : f32
    %22 = vector.broadcast %cst_15 : f32 to vector<8x32xf32>
    %23 = arith.mulf %22, %21 : vector<8x32xf32>
    %cst_16 = arith.constant 1.000000e+00 : f32
    %24 = vector.broadcast %cst_16 : f32 to vector<8x32xf32>
    %25 = arith.subf %23, %24 : vector<8x32xf32>
    %26 = vector.extract_strided_slice %18 {offsets = [0, 96], sizes = [8, 32], strides = [1, 1]} : vector<8x128xf32> to vector<8x32xf32>
    %27 = arith.mulf %20, %10 : vector<8x32xf32>
    %28 = arith.mulf %19, %25 : vector<8x32xf32>
    %29 = arith.addf %27, %28 : vector<8x32xf32>
    %30 = math.tanh %29 : vector<8x32xf32>
    %31 = arith.mulf %26, %30 : vector<8x32xf32>
    %cst_17 = arith.constant dense<0.000000e+00> : vector<8x128xf32>
    %32 = tpu.matmul %31, %7, %cst_17 {dimension_numbers = #tpu.dot_dimension_numbers<[1], [0], [0], [1], [0, 0, 1, 1], [], []>} : vector<8x32xf32>, vector<32x128xf32>, vector<8x128xf32> -> vector<8x128xf32>
    %33 = vector.broadcast %8 : vector<1x128xf32> to vector<8x128xf32>
    %34 = arith.addf %32, %33 : vector<8x128xf32>
    %c0_18 = arith.constant 0 : index
    %c0_19 = arith.constant 0 : index
    %35 = vector.load %arg6[%c0_18, %c0_19] : memref<64x128xf32, #tpu.memory_space<vmem>>, vector<8x128xf32>
    tpu.vector_store %arg6[%c0_18, %c0_19], %34 {strides = array<i32>} : memref<64x128xf32, #tpu.memory_space<vmem>>, vector<8x128xf32>,
    %36 = vector.extract_strided_slice %5 {offsets = [8, 0], sizes = [8, 128], strides = [1, 1]} : vector<64x128xf32> to vector<8x128xf32>
    %cst_20 = arith.constant dense<0.000000e+00> : vector<8x128xf32>
    %37 = tpu.matmul %31, %6, %cst_20 {dimension_numbers = #tpu.dot_dimension_numbers<[1], [0], [0], [1], [0, 0, 1, 1], [], []>} : vector<8x32xf32>, vector<32x128xf32>, vector<8x128xf32> -> vector<8x128xf32>
    %38 = arith.addf %36, %37 : vector<8x128xf32>
    %39 = arith.negf %38 : vector<8x128xf32>
    %40 = math.exp %39 : vector<8x128xf32>
    %cst_21 = arith.constant 1.000000e+00 : f32
    %41 = vector.broadcast %cst_21 : f32 to vector<8x128xf32>
    %42 = arith.addf %41, %40 : vector<8x128xf32>
    %43 = arith.divf %41, %42 : vector<8x128xf32>
    %44 = vector.extract_strided_slice %43 {offsets = [0, 0], sizes = [8, 32], strides = [1, 1]} : vector<8x128xf32> to vector<8x32xf32>
    %45 = vector.extract_strided_slice %43 {offsets = [0, 32], sizes = [8, 32], strides = [1, 1]} : vector<8x128xf32> to vector<8x32xf32>
    %46 = vector.extract_strided_slice %43 {offsets = [0, 64], sizes = [8, 32], strides = [1, 1]} : vector<8x128xf32> to vector<8x32xf32>
    %cst_22 = arith.constant 2.000000e+00 : f32
    %47 = vector.broadcast %cst_22 : f32 to vector<8x32xf32>
    %48 = arith.mulf %47, %46 : vector<8x32xf32>
    %cst_23 = arith.constant 1.000000e+00 : f32
    %49 = vector.broadcast %cst_23 : f32 to vector<8x32xf32>
    %50 = arith.subf %48, %49 : vector<8x32xf32>
    %51 = vector.extract_strided_slice %43 {offsets = [0, 96], sizes = [8, 32], strides = [1, 1]} : vector<8x128xf32> to vector<8x32xf32>
    %52 = arith.mulf %45, %29 : vector<8x32xf32>
    %53 = arith.mulf %44, %50 : vector<8x32xf32>
    %54 = arith.addf %52, %53 : vector<8x32xf32>
    %55 = math.tanh %54 : vector<8x32xf32>
    %56 = arith.mulf %51, %55 : vector<8x32xf32>
    %cst_24 = arith.constant dense<0.000000e+00> : vector<8x128xf32>
    %57 = tpu.matmul %56, %7, %cst_24 {dimension_numbers = #tpu.dot_dimension_numbers<[1], [0], [0], [1], [0, 0, 1, 1], [], []>} : vector<8x32xf32>, vector<32x128xf32>, vector<8x128xf32> -> vector<8x128xf32>
    %58 = vector.broadcast %8 : vector<1x128xf32> to vector<8x128xf32>
    %59 = arith.addf %57, %58 : vector<8x128xf32>
    %c8 = arith.constant 8 : index
    %c0_25 = arith.constant 0 : index
    %60 = vector.load %arg6[%c8, %c0_25] : memref<64x128xf32, #tpu.memory_space<vmem>>, vector<8x128xf32>
    tpu.vector_store %arg6[%c8, %c0_25], %59 {strides = array<i32>} : memref<64x128xf32, #tpu.memory_space<vmem>>, vector<8x128xf32>,
    %61 = vector.extract_strided_slice %5 {offsets = [16, 0], sizes = [8, 128], strides = [1, 1]} : vector<64x128xf32> to vector<8x128xf32>
    %cst_26 = arith.constant dense<0.000000e+00> : vector<8x128xf32>
    %62 = tpu.matmul %56, %6, %cst_26 {dimension_numbers = #tpu.dot_dimension_numbers<[1], [0], [0], [1], [0, 0, 1, 1], [], []>} : vector<8x32xf32>, vector<32x128xf32>, vector<8x128xf32> -> vector<8x128xf32>
    %63 = arith.addf %61, %62 : vector<8x128xf32>
    %64 = arith.negf %63 : vector<8x128xf32>
    %65 = math.exp %64 : vector<8x128xf32>
    %cst_27 = arith.constant 1.000000e+00 : f32
    %66 = vector.broadcast %cst_27 : f32 to vector<8x128xf32>
    %67 = arith.addf %66, %65 : vector<8x128xf32>
    %68 = arith.divf %66, %67 : vector<8x128xf32>
    %69 = vector.extract_strided_slice %68 {offsets = [0, 0], sizes = [8, 32], strides = [1, 1]} : vector<8x128xf32> to vector<8x32xf32>
    %70 = vector.extract_strided_slice %68 {offsets = [0, 32], sizes = [8, 32], strides = [1, 1]} : vector<8x128xf32> to vector<8x32xf32>
    %71 = vector.extract_strided_slice %68 {offsets = [0, 64], sizes = [8, 32], strides = [1, 1]} : vector<8x128xf32> to vector<8x32xf32>
    %cst_28 = arith.constant 2.000000e+00 : f32
    %72 = vector.broadcast %cst_28 : f32 to vector<8x32xf32>
    %73 = arith.mulf %72, %71 : vector<8x32xf32>
    %cst_29 = arith.constant 1.000000e+00 : f32
    %74 = vector.broadcast %cst_29 : f32 to vector<8x32xf32>
    %75 = arith.subf %73, %74 : vector<8x32xf32>
    %76 = vector.extract_strided_slice %68 {offsets = [0, 96], sizes = [8, 32], strides = [1, 1]} : vector<8x128xf32> to vector<8x32xf32>
    %77 = arith.mulf %70, %54 : vector<8x32xf32>
    %78 = arith.mulf %69, %75 : vector<8x32xf32>
    %79 = arith.addf %77, %78 : vector<8x32xf32>
    %80 = math.tanh %79 : vector<8x32xf32>
    %81 = arith.mulf %76, %80 : vector<8x32xf32>
    %cst_30 = arith.constant dense<0.000000e+00> : vector<8x128xf32>
    %82 = tpu.matmul %81, %7, %cst_30 {dimension_numbers = #tpu.dot_dimension_numbers<[1], [0], [0], [1], [0, 0, 1, 1], [], []>} : vector<8x32xf32>, vector<32x128xf32>, vector<8x128xf32> -> vector<8x128xf32>
    %83 = vector.broadcast %8 : vector<1x128xf32> to vector<8x128xf32>
    %84 = arith.addf %82, %83 : vector<8x128xf32>
    %c16 = arith.constant 16 : index
    %c0_31 = arith.constant 0 : index
    %85 = vector.load %arg6[%c16, %c0_31] : memref<64x128xf32, #tpu.memory_space<vmem>>, vector<8x128xf32>
    tpu.vector_store %arg6[%c16, %c0_31], %84 {strides = array<i32>} : memref<64x128xf32, #tpu.memory_space<vmem>>, vector<8x128xf32>,
    %86 = vector.extract_strided_slice %5 {offsets = [24, 0], sizes = [8, 128], strides = [1, 1]} : vector<64x128xf32> to vector<8x128xf32>
    %cst_32 = arith.constant dense<0.000000e+00> : vector<8x128xf32>
    %87 = tpu.matmul %81, %6, %cst_32 {dimension_numbers = #tpu.dot_dimension_numbers<[1], [0], [0], [1], [0, 0, 1, 1], [], []>} : vector<8x32xf32>, vector<32x128xf32>, vector<8x128xf32> -> vector<8x128xf32>
    %88 = arith.addf %86, %87 : vector<8x128xf32>
    %89 = arith.negf %88 : vector<8x128xf32>
    %90 = math.exp %89 : vector<8x128xf32>
    %cst_33 = arith.constant 1.000000e+00 : f32
    %91 = vector.broadcast %cst_33 : f32 to vector<8x128xf32>
    %92 = arith.addf %91, %90 : vector<8x128xf32>
    %93 = arith.divf %91, %92 : vector<8x128xf32>
    %94 = vector.extract_strided_slice %93 {offsets = [0, 0], sizes = [8, 32], strides = [1, 1]} : vector<8x128xf32> to vector<8x32xf32>
    %95 = vector.extract_strided_slice %93 {offsets = [0, 32], sizes = [8, 32], strides = [1, 1]} : vector<8x128xf32> to vector<8x32xf32>
    %96 = vector.extract_strided_slice %93 {offsets = [0, 64], sizes = [8, 32], strides = [1, 1]} : vector<8x128xf32> to vector<8x32xf32>
    %cst_34 = arith.constant 2.000000e+00 : f32
    %97 = vector.broadcast %cst_34 : f32 to vector<8x32xf32>
    %98 = arith.mulf %97, %96 : vector<8x32xf32>
    %cst_35 = arith.constant 1.000000e+00 : f32
    %99 = vector.broadcast %cst_35 : f32 to vector<8x32xf32>
    %100 = arith.subf %98, %99 : vector<8x32xf32>
    %101 = vector.extract_strided_slice %93 {offsets = [0, 96], sizes = [8, 32], strides = [1, 1]} : vector<8x128xf32> to vector<8x32xf32>
    %102 = arith.mulf %95, %79 : vector<8x32xf32>
    %103 = arith.mulf %94, %100 : vector<8x32xf32>
    %104 = arith.addf %102, %103 : vector<8x32xf32>
    %105 = math.tanh %104 : vector<8x32xf32>
    %106 = arith.mulf %101, %105 : vector<8x32xf32>
    %cst_36 = arith.constant dense<0.000000e+00> : vector<8x128xf32>
    %107 = tpu.matmul %106, %7, %cst_36 {dimension_numbers = #tpu.dot_dimension_numbers<[1], [0], [0], [1], [0, 0, 1, 1], [], []>} : vector<8x32xf32>, vector<32x128xf32>, vector<8x128xf32> -> vector<8x128xf32>
    %108 = vector.broadcast %8 : vector<1x128xf32> to vector<8x128xf32>
    %109 = arith.addf %107, %108 : vector<8x128xf32>
    %c24 = arith.constant 24 : index
    %c0_37 = arith.constant 0 : index
    %110 = vector.load %arg6[%c24, %c0_37] : memref<64x128xf32, #tpu.memory_space<vmem>>, vector<8x128xf32>
    tpu.vector_store %arg6[%c24, %c0_37], %109 {strides = array<i32>} : memref<64x128xf32, #tpu.memory_space<vmem>>, vector<8x128xf32>,
    %111 = vector.extract_strided_slice %5 {offsets = [32, 0], sizes = [8, 128], strides = [1, 1]} : vector<64x128xf32> to vector<8x128xf32>
    %cst_38 = arith.constant dense<0.000000e+00> : vector<8x128xf32>
    %112 = tpu.matmul %106, %6, %cst_38 {dimension_numbers = #tpu.dot_dimension_numbers<[1], [0], [0], [1], [0, 0, 1, 1], [], []>} : vector<8x32xf32>, vector<32x128xf32>, vector<8x128xf32> -> vector<8x128xf32>
    %113 = arith.addf %111, %112 : vector<8x128xf32>
    %114 = arith.negf %113 : vector<8x128xf32>
    %115 = math.exp %114 : vector<8x128xf32>
    %cst_39 = arith.constant 1.000000e+00 : f32
    %116 = vector.broadcast %cst_39 : f32 to vector<8x128xf32>
    %117 = arith.addf %116, %115 : vector<8x128xf32>
    %118 = arith.divf %116, %117 : vector<8x128xf32>
    %119 = vector.extract_strided_slice %118 {offsets = [0, 0], sizes = [8, 32], strides = [1, 1]} : vector<8x128xf32> to vector<8x32xf32>
    %120 = vector.extract_strided_slice %118 {offsets = [0, 32], sizes = [8, 32], strides = [1, 1]} : vector<8x128xf32> to vector<8x32xf32>
    %121 = vector.extract_strided_slice %118 {offsets = [0, 64], sizes = [8, 32], strides = [1, 1]} : vector<8x128xf32> to vector<8x32xf32>
    %cst_40 = arith.constant 2.000000e+00 : f32
    %122 = vector.broadcast %cst_40 : f32 to vector<8x32xf32>
    %123 = arith.mulf %122, %121 : vector<8x32xf32>
    %cst_41 = arith.constant 1.000000e+00 : f32
    %124 = vector.broadcast %cst_41 : f32 to vector<8x32xf32>
    %125 = arith.subf %123, %124 : vector<8x32xf32>
    %126 = vector.extract_strided_slice %118 {offsets = [0, 96], sizes = [8, 32], strides = [1, 1]} : vector<8x128xf32> to vector<8x32xf32>
    %127 = arith.mulf %120, %104 : vector<8x32xf32>
    %128 = arith.mulf %119, %125 : vector<8x32xf32>
    %129 = arith.addf %127, %128 : vector<8x32xf32>
    %130 = math.tanh %129 : vector<8x32xf32>
    %131 = arith.mulf %126, %130 : vector<8x32xf32>
    %cst_42 = arith.constant dense<0.000000e+00> : vector<8x128xf32>
    %132 = tpu.matmul %131, %7, %cst_42 {dimension_numbers = #tpu.dot_dimension_numbers<[1], [0], [0], [1], [0, 0, 1, 1], [], []>} : vector<8x32xf32>, vector<32x128xf32>, vector<8x128xf32> -> vector<8x128xf32>
    %133 = vector.broadcast %8 : vector<1x128xf32> to vector<8x128xf32>
    %134 = arith.addf %132, %133 : vector<8x128xf32>
    %c32 = arith.constant 32 : index
    %c0_43 = arith.constant 0 : index
    %135 = vector.load %arg6[%c32, %c0_43] : memref<64x128xf32, #tpu.memory_space<vmem>>, vector<8x128xf32>
    tpu.vector_store %arg6[%c32, %c0_43], %134 {strides = array<i32>} : memref<64x128xf32, #tpu.memory_space<vmem>>, vector<8x128xf32>,
    %136 = vector.extract_strided_slice %5 {offsets = [40, 0], sizes = [8, 128], strides = [1, 1]} : vector<64x128xf32> to vector<8x128xf32>
    %cst_44 = arith.constant dense<0.000000e+00> : vector<8x128xf32>
    %137 = tpu.matmul %131, %6, %cst_44 {dimension_numbers = #tpu.dot_dimension_numbers<[1], [0], [0], [1], [0, 0, 1, 1], [], []>} : vector<8x32xf32>, vector<32x128xf32>, vector<8x128xf32> -> vector<8x128xf32>
    %138 = arith.addf %136, %137 : vector<8x128xf32>
    %139 = arith.negf %138 : vector<8x128xf32>
    %140 = math.exp %139 : vector<8x128xf32>
    %cst_45 = arith.constant 1.000000e+00 : f32
    %141 = vector.broadcast %cst_45 : f32 to vector<8x128xf32>
    %142 = arith.addf %141, %140 : vector<8x128xf32>
    %143 = arith.divf %141, %142 : vector<8x128xf32>
    %144 = vector.extract_strided_slice %143 {offsets = [0, 0], sizes = [8, 32], strides = [1, 1]} : vector<8x128xf32> to vector<8x32xf32>
    %145 = vector.extract_strided_slice %143 {offsets = [0, 32], sizes = [8, 32], strides = [1, 1]} : vector<8x128xf32> to vector<8x32xf32>
    %146 = vector.extract_strided_slice %143 {offsets = [0, 64], sizes = [8, 32], strides = [1, 1]} : vector<8x128xf32> to vector<8x32xf32>
    %cst_46 = arith.constant 2.000000e+00 : f32
    %147 = vector.broadcast %cst_46 : f32 to vector<8x32xf32>
    %148 = arith.mulf %147, %146 : vector<8x32xf32>
    %cst_47 = arith.constant 1.000000e+00 : f32
    %149 = vector.broadcast %cst_47 : f32 to vector<8x32xf32>
    %150 = arith.subf %148, %149 : vector<8x32xf32>
    %151 = vector.extract_strided_slice %143 {offsets = [0, 96], sizes = [8, 32], strides = [1, 1]} : vector<8x128xf32> to vector<8x32xf32>
    %152 = arith.mulf %145, %129 : vector<8x32xf32>
    %153 = arith.mulf %144, %150 : vector<8x32xf32>
    %154 = arith.addf %152, %153 : vector<8x32xf32>
    %155 = math.tanh %154 : vector<8x32xf32>
    %156 = arith.mulf %151, %155 : vector<8x32xf32>
    %cst_48 = arith.constant dense<0.000000e+00> : vector<8x128xf32>
    %157 = tpu.matmul %156, %7, %cst_48 {dimension_numbers = #tpu.dot_dimension_numbers<[1], [0], [0], [1], [0, 0, 1, 1], [], []>} : vector<8x32xf32>, vector<32x128xf32>, vector<8x128xf32> -> vector<8x128xf32>
    %158 = vector.broadcast %8 : vector<1x128xf32> to vector<8x128xf32>
    %159 = arith.addf %157, %158 : vector<8x128xf32>
    %c40 = arith.constant 40 : index
    %c0_49 = arith.constant 0 : index
    %160 = vector.load %arg6[%c40, %c0_49] : memref<64x128xf32, #tpu.memory_space<vmem>>, vector<8x128xf32>
    tpu.vector_store %arg6[%c40, %c0_49], %159 {strides = array<i32>} : memref<64x128xf32, #tpu.memory_space<vmem>>, vector<8x128xf32>,
    %161 = vector.extract_strided_slice %5 {offsets = [48, 0], sizes = [8, 128], strides = [1, 1]} : vector<64x128xf32> to vector<8x128xf32>
    %cst_50 = arith.constant dense<0.000000e+00> : vector<8x128xf32>
    %162 = tpu.matmul %156, %6, %cst_50 {dimension_numbers = #tpu.dot_dimension_numbers<[1], [0], [0], [1], [0, 0, 1, 1], [], []>} : vector<8x32xf32>, vector<32x128xf32>, vector<8x128xf32> -> vector<8x128xf32>
    %163 = arith.addf %161, %162 : vector<8x128xf32>
    %164 = arith.negf %163 : vector<8x128xf32>
    %165 = math.exp %164 : vector<8x128xf32>
    %cst_51 = arith.constant 1.000000e+00 : f32
    %166 = vector.broadcast %cst_51 : f32 to vector<8x128xf32>
    %167 = arith.addf %166, %165 : vector<8x128xf32>
    %168 = arith.divf %166, %167 : vector<8x128xf32>
    %169 = vector.extract_strided_slice %168 {offsets = [0, 0], sizes = [8, 32], strides = [1, 1]} : vector<8x128xf32> to vector<8x32xf32>
    %170 = vector.extract_strided_slice %168 {offsets = [0, 32], sizes = [8, 32], strides = [1, 1]} : vector<8x128xf32> to vector<8x32xf32>
    %171 = vector.extract_strided_slice %168 {offsets = [0, 64], sizes = [8, 32], strides = [1, 1]} : vector<8x128xf32> to vector<8x32xf32>
    %cst_52 = arith.constant 2.000000e+00 : f32
    %172 = vector.broadcast %cst_52 : f32 to vector<8x32xf32>
    %173 = arith.mulf %172, %171 : vector<8x32xf32>
    %cst_53 = arith.constant 1.000000e+00 : f32
    %174 = vector.broadcast %cst_53 : f32 to vector<8x32xf32>
    %175 = arith.subf %173, %174 : vector<8x32xf32>
    %176 = vector.extract_strided_slice %168 {offsets = [0, 96], sizes = [8, 32], strides = [1, 1]} : vector<8x128xf32> to vector<8x32xf32>
    %177 = arith.mulf %170, %154 : vector<8x32xf32>
    %178 = arith.mulf %169, %175 : vector<8x32xf32>
    %179 = arith.addf %177, %178 : vector<8x32xf32>
    %180 = math.tanh %179 : vector<8x32xf32>
    %181 = arith.mulf %176, %180 : vector<8x32xf32>
    %cst_54 = arith.constant dense<0.000000e+00> : vector<8x128xf32>
    %182 = tpu.matmul %181, %7, %cst_54 {dimension_numbers = #tpu.dot_dimension_numbers<[1], [0], [0], [1], [0, 0, 1, 1], [], []>} : vector<8x32xf32>, vector<32x128xf32>, vector<8x128xf32> -> vector<8x128xf32>
    %183 = vector.broadcast %8 : vector<1x128xf32> to vector<8x128xf32>
    %184 = arith.addf %182, %183 : vector<8x128xf32>
    %c48 = arith.constant 48 : index
    %c0_55 = arith.constant 0 : index
    %185 = vector.load %arg6[%c48, %c0_55] : memref<64x128xf32, #tpu.memory_space<vmem>>, vector<8x128xf32>
    tpu.vector_store %arg6[%c48, %c0_55], %184 {strides = array<i32>} : memref<64x128xf32, #tpu.memory_space<vmem>>, vector<8x128xf32>,
    %186 = vector.extract_strided_slice %5 {offsets = [56, 0], sizes = [8, 128], strides = [1, 1]} : vector<64x128xf32> to vector<8x128xf32>
    %cst_56 = arith.constant dense<0.000000e+00> : vector<8x128xf32>
    %187 = tpu.matmul %181, %6, %cst_56 {dimension_numbers = #tpu.dot_dimension_numbers<[1], [0], [0], [1], [0, 0, 1, 1], [], []>} : vector<8x32xf32>, vector<32x128xf32>, vector<8x128xf32> -> vector<8x128xf32>
    %188 = arith.addf %186, %187 : vector<8x128xf32>
    %189 = arith.negf %188 : vector<8x128xf32>
    %190 = math.exp %189 : vector<8x128xf32>
    %cst_57 = arith.constant 1.000000e+00 : f32
    %191 = vector.broadcast %cst_57 : f32 to vector<8x128xf32>
    %192 = arith.addf %191, %190 : vector<8x128xf32>
    %193 = arith.divf %191, %192 : vector<8x128xf32>
    %194 = vector.extract_strided_slice %193 {offsets = [0, 0], sizes = [8, 32], strides = [1, 1]} : vector<8x128xf32> to vector<8x32xf32>
    %195 = vector.extract_strided_slice %193 {offsets = [0, 32], sizes = [8, 32], strides = [1, 1]} : vector<8x128xf32> to vector<8x32xf32>
    %196 = vector.extract_strided_slice %193 {offsets = [0, 64], sizes = [8, 32], strides = [1, 1]} : vector<8x128xf32> to vector<8x32xf32>
    %cst_58 = arith.constant 2.000000e+00 : f32
    %197 = vector.broadcast %cst_58 : f32 to vector<8x32xf32>
    %198 = arith.mulf %197, %196 : vector<8x32xf32>
    %cst_59 = arith.constant 1.000000e+00 : f32
    %199 = vector.broadcast %cst_59 : f32 to vector<8x32xf32>
    %200 = arith.subf %198, %199 : vector<8x32xf32>
    %201 = vector.extract_strided_slice %193 {offsets = [0, 96], sizes = [8, 32], strides = [1, 1]} : vector<8x128xf32> to vector<8x32xf32>
    %202 = arith.mulf %195, %179 : vector<8x32xf32>
    %203 = arith.mulf %194, %200 : vector<8x32xf32>
    %204 = arith.addf %202, %203 : vector<8x32xf32>
    %205 = math.tanh %204 : vector<8x32xf32>
    %206 = arith.mulf %201, %205 : vector<8x32xf32>
    %cst_60 = arith.constant dense<0.000000e+00> : vector<8x128xf32>
    %207 = tpu.matmul %206, %7, %cst_60 {dimension_numbers = #tpu.dot_dimension_numbers<[1], [0], [0], [1], [0, 0, 1, 1], [], []>} : vector<8x32xf32>, vector<32x128xf32>, vector<8x128xf32> -> vector<8x128xf32>
    %208 = vector.broadcast %8 : vector<1x128xf32> to vector<8x128xf32>
    %209 = arith.addf %207, %208 : vector<8x128xf32>
    %c56 = arith.constant 56 : index
    %c0_61 = arith.constant 0 : index
    %210 = vector.load %arg6[%c56, %c0_61] : memref<64x128xf32, #tpu.memory_space<vmem>>, vector<8x128xf32>
    tpu.vector_store %arg6[%c56, %c0_61], %209 {strides = array<i32>} : memref<64x128xf32, #tpu.memory_space<vmem>>, vector<8x128xf32>,
    return
  }
}

</mosaic_0001>

<llo_original>
// kernel: vanilla_rnn_forward.1
$region0: #{vanilla_rnn_forward.1}
  #allocation0 [shape = 'u32[]', space=smem, size = 0x4, offset = 0x4, fixed_abs, tag = 'smem constant byte address 0x4 - core index']
  #allocation1 [shape = 'u32[144,128]{1,0:T(1,128)}', space=vmem, size = 0x12000, scoped, tag = 'internal scratch']
  %s0 = inlined_call_operand.vmem [shape: f32[64,8], index: 0, kind: input, shape index: {}]
  %s1 = inlined_call_operand.vmem [shape: f32[8,128], index: 1, kind: input, shape index: {}]
  %s2 = inlined_call_operand.vmem [shape: f32[32,128], index: 2, kind: input, shape index: {}]
  %s3 = inlined_call_operand.vmem [shape: f32[1,128], index: 3, kind: input, shape index: {}]
  %s4 = inlined_call_operand.vmem [shape: f32[32,128], index: 4, kind: input, shape index: {}]
  %s5 = inlined_call_operand.vmem [shape: f32[1,128], index: 5, kind: input, shape index: {}]
  %s6 = inlined_call_operand.vmem [shape: f32[64,128], index: 6, kind: output, shape index: {}]
  %s7 = sld [smem:[#allocation0]]
  $region34: #{vanilla_rnn_forward.1} parent=0
    _
  %s9 = ssub.s32 1, %s7
  %s10 = scalar_select 0, %s9, %s7
  // Predicated region
  $region2: #{vanilla_rnn_forward.1} parent=0 // pred_check
    _
  $region3: #{vanilla_rnn_forward.1} parent=0 // pred_check_branch
    %12 = sbr.rel (0) target = $region5
  $region4: #{vanilla_rnn_forward.1} parent=0 // pred_region
    _
  $region5: #{vanilla_rnn_forward.1} parent=0 // pred_fallthru
    _
  // Predicated region
  $region6: #{vanilla_rnn_forward.1} parent=0 // pred_check
    _
  $region7: #{vanilla_rnn_forward.1} parent=0 // pred_check_branch
    %14 = sbr.rel (0) target = $region9
  $region8: #{vanilla_rnn_forward.1} parent=0 // pred_region
    _
  $region9: #{vanilla_rnn_forward.1} parent=0 // pred_fallthru
    _
  // Predicated region
  $region10: #{vanilla_rnn_forward.1} parent=0 // pred_check
    _
  $region11: #{vanilla_rnn_forward.1} parent=0 // pred_check_branch
    %16 = sbr.rel (0) target = $region13
  $region12: #{vanilla_rnn_forward.1} parent=0 // pred_region
    _
  $region13: #{vanilla_rnn_forward.1} parent=0 // pred_fallthru
    _
  // Predicated region
  $region14: #{vanilla_rnn_forward.1} parent=0 // pred_check
    _
  $region15: #{vanilla_rnn_forward.1} parent=0 // pred_check_branch
    %18 = sbr.rel (0) target = $region17
  $region16: #{vanilla_rnn_forward.1} parent=0 // pred_region
    _
  $region17: #{vanilla_rnn_forward.1} parent=0 // pred_fallthru
    _
  // Predicated region
  $region18: #{vanilla_rnn_forward.1} parent=0 // pred_check
    _
  $region19: #{vanilla_rnn_forward.1} parent=0 // pred_check_branch
    %20 = sbr.rel (0) target = $region21
  $region20: #{vanilla_rnn_forward.1} parent=0 // pred_region
    _
  $region21: #{vanilla_rnn_forward.1} parent=0 // pred_fallthru
    _
  // Predicated region
  $region22: #{vanilla_rnn_forward.1} parent=0 // pred_check
    _
  $region23: #{vanilla_rnn_forward.1} parent=0 // pred_check_branch
    %22 = sbr.rel (0) target = $region25
  $region24: #{vanilla_rnn_forward.1} parent=0 // pred_region
    _
  $region25: #{vanilla_rnn_forward.1} parent=0 // pred_fallthru
    _
  %v23 = vld [vmem:[%s0] sm:$0xff]
  %v24 = vld [vmem:[%s0 + $0x8] sm:$0xff]
  %v25 = vld [vmem:[%s0 + $0x10] sm:$0xff]
  %v26 = vld [vmem:[%s0 + $0x18] sm:$0xff]
  %v27 = vld [vmem:[%s0 + $0x20] sm:$0xff]
  %v28 = vld [vmem:[%s0 + $0x28] sm:$0xff]
  %v29 = vld [vmem:[%s0 + $0x30] sm:$0xff]
  %v30 = vld [vmem:[%s0 + $0x38] sm:$0xff]
  %v31 = vld [vmem:[%s1] sm:$0xff]
  %v32 = vld [vmem:[%s3] sm:$0x1]
  %v34 = vlaneseq
  %v35 = vshrl.u32 %v34, 7
  %v36 = vsub.s32 0, %v35
  %v37 = vrot.slane %v32, %v36
  %vm39 = vcmask 64512
  %v41 = vsel %vm39, %v23, 0
  %v44 = vsel %vm39, %v24, 0
  %v47 = vsel %vm39, %v25, 0
  %v50 = vsel %vm39, %v26, 0
  %v53 = vsel %vm39, %v27, 0
  %v56 = vsel %vm39, %v28, 0
  %v59 = vsel %vm39, %v29, 0
  %v62 = vsel %vm39, %v30, 0
  %64 = vmatprep.subr.mxu0 0.0
  %65 = vmatpush1.msra.mxu0 %v31
  %66 = vmatprep.subr.mxu0 0.0
  %67 = vmatpush1.msra.mxu0 0.0
  %68 = vmatprep.subr.mxu0 0.0
  %69 = vmatpush1.msra.mxu0 0.0
  %70 = vmatprep.subr.mxu0 0.0
  %71 = vmatpush1.msra.mxu0 0.0
  %72 = vmatprep.subr.mxu0 0.0
  %73 = vmatpush1.msra.mxu0 0.0
  %74 = vmatprep.subr.mxu0 0.0
  %75 = vmatpush1.msra.mxu0 0.0
  %76 = vmatprep.subr.mxu0 0.0
  %77 = vmatpush1.msra.mxu0 0.0
  %78 = vmatprep.subr.mxu0 0.0
  %79 = vmatpush1.msra.mxu0 0.0
  %80 = vmatprep.subr.mxu0 0.0
  %81 = vmatpush1.msra.mxu0 0.0
  %82 = vmatprep.subr.mxu0 0.0
  %83 = vmatpush1.msra.mxu0 0.0
  %84 = vmatprep.subr.mxu0 0.0
  %85 = vmatpush1.msra.mxu0 0.0
  %86 = vmatprep.subr.mxu0 0.0
  %87 = vmatpush1.msra.mxu0 0.0
  %88 = vmatprep.subr.mxu0 0.0
  %89 = vmatpush1.msra.mxu0 0.0
  %90 = vmatprep.subr.mxu0 0.0
  %91 = vmatpush1.msra.mxu0 0.0
  %92 = vmatprep.subr.mxu0 0.0
  %93 = vmatpush1.msra.mxu0 0.0
  %94 = vmatprep.subr.mxu0 0.0
  %95 = vmatpush1.msra.mxu0 0.0
  %96 = vmatprep.subr.mxu0 0.0
  %97 = vmatpush1.msra.mxu0 0.0
  %98 = vmatprep.subr.mxu0 0.0
  %99 = vmatpush1.msra.mxu0 0.0
  %100 = vmatprep.subr.mxu0 0.0
  %101 = vmatpush1.msra.mxu0 0.0
  %102 = vmatprep.subr.mxu0 0.0
  %103 = vmatpush1.msra.mxu0 0.0
  %104 = vmatprep.subr.mxu0 0.0
  %105 = vmatpush1.msra.mxu0 0.0
  %106 = vmatprep.subr.mxu0 0.0
  %107 = vmatpush1.msra.mxu0 0.0
  %108 = vmatprep.subr.mxu0 0.0
  %109 = vmatpush1.msra.mxu0 0.0
  %110 = vmatprep.subr.mxu0 0.0
  %111 = vmatpush1.msra.mxu0 0.0
  %112 = vmatprep.subr.mxu0 0.0
  %113 = vmatpush1.msra.mxu0 0.0
  %114 = vmatprep.subr.mxu0 0.0
  %115 = vmatpush1.msra.mxu0 0.0
  %116 = vmatprep.subr.mxu0 0.0
  %117 = vmatpush1.msra.mxu0 0.0
  %118 = vmatprep.subr.mxu0 0.0
  %119 = vmatpush1.msra.mxu0 0.0
  %120 = vmatprep.subr.mxu0 0.0
  %121 = vmatpush1.msra.mxu0 0.0
  %122 = vmatprep.subr.mxu0 0.0
  %123 = vmatpush1.msra.mxu0 0.0
  %124 = vmatprep.subr.mxu0 0.0
  %125 = vmatpush1.msra.mxu0 0.0
  %126 = vmatprep.subr.mxu0 0.0
  %127 = vmatpush1.msra.mxu0 0.0
  %128 = vmatprep.mubr.f32.mxu0 0.0
  %129 = vmatmul.mubr.f32.gmra.mrb[0].mxu0 %v41
  %v130 = vpop.f32.mrb[0].mxu0
  %v131 = vadd.f32 %v37, %v130
  %v132 = vpop.f32.mrb[0].mxu0
  %133 = vmatprep.mubr.f32.mxu0 0.0
  %134 = vmatmul.mubr.f32.gmra.mrb[0].mxu0 %v44
  %v135 = vpop.f32.mrb[0].mxu0
  %v136 = vadd.f32 %v37, %v135
  %v137 = vpop.f32.mrb[0].mxu0
  %138 = vmatprep.mubr.f32.mxu0 0.0
  %139 = vmatmul.mubr.f32.gmra.mrb[0].mxu0 %v47
  %v140 = vpop.f32.mrb[0].mxu0
  %v141 = vadd.f32 %v37, %v140
  %v142 = vpop.f32.mrb[0].mxu0
  %143 = vmatprep.mubr.f32.mxu0 0.0
  %144 = vmatmul.mubr.f32.gmra.mrb[0].mxu0 %v50
  %v145 = vpop.f32.mrb[0].mxu0
  %v146 = vadd.f32 %v37, %v145
  %v147 = vpop.f32.mrb[0].mxu0
  %148 = vmatprep.mubr.f32.mxu0 0.0
  %149 = vmatmul.mubr.f32.gmra.mrb[0].mxu0 %v53
  %v150 = vpop.f32.mrb[0].mxu0
  %v151 = vadd.f32 %v37, %v150
  %v152 = vpop.f32.mrb[0].mxu0
  %153 = vmatprep.mubr.f32.mxu0 0.0
  %154 = vmatmul.mubr.f32.gmra.mrb[0].mxu0 %v56
  %v155 = vpop.f32.mrb[0].mxu0
  %v156 = vadd.f32 %v37, %v155
  %v157 = vpop.f32.mrb[0].mxu0
  %158 = vmatprep.mubr.f32.mxu0 0.0
  %159 = vmatmul.mubr.f32.gmra.mrb[0].mxu0 %v59
  %v160 = vpop.f32.mrb[0].mxu0
  %v161 = vadd.f32 %v37, %v160
  %v162 = vpop.f32.mrb[0].mxu0
  %163 = vmatprep.mubr.f32.mxu0 0.0
  %164 = vmatmul.mubr.f32.gmra.mrb[0].mxu0 %v62
  %v165 = vpop.f32.mrb[0].mxu0
  %v166 = vadd.f32 %v37, %v165
  %v167 = vpop.f32.mrb[0].mxu0
  %168 = vdwg.mxu0
  %v169 = vld [vmem:[%s2] sm:$0xff]
  %v170 = vld [vmem:[%s2 + $0x8] sm:$0xff]
  %v171 = vld [vmem:[%s2 + $0x10] sm:$0xff]
  %v172 = vld [vmem:[%s2 + $0x18] sm:$0xff]
  %v173 = vld [vmem:[%s4] sm:$0xff]
  %v174 = vld [vmem:[%s4 + $0x8] sm:$0xff]
  %v175 = vld [vmem:[%s4 + $0x10] sm:$0xff]
  %v176 = vld [vmem:[%s4 + $0x18] sm:$0xff]
  %v177 = vld [vmem:[%s5] sm:$0x1]
  %vm178 = vcmask 261120
  %v180 = vsel %vm178, 0.0, 0
  %182 = vmatprep.subr.mxu0 0.0
  %183 = vmatpush1.msra.mxu0 %v169
  %184 = vmatprep.subr.mxu0 0.0
  %185 = vmatpush1.msra.mxu0 %v170
  %186 = vmatprep.subr.mxu0 0.0
  %187 = vmatpush1.msra.mxu0 %v171
  %188 = vmatprep.subr.mxu0 0.0
  %189 = vmatpush1.msra.mxu0 %v172
  %190 = vmatprep.subr.mxu0 0.0
  %191 = vmatpush1.msra.mxu0 0.0
  %192 = vmatprep.subr.mxu0 0.0
  %193 = vmatpush1.msra.mxu0 0.0
  %194 = vmatprep.subr.mxu0 0.0
  %195 = vmatpush1.msra.mxu0 0.0
  %196 = vmatprep.subr.mxu0 0.0
  %197 = vmatpush1.msra.mxu0 0.0
  %198 = vmatprep.subr.mxu0 0.0
  %199 = vmatpush1.msra.mxu0 0.0
  %200 = vmatprep.subr.mxu0 0.0
  %201 = vmatpush1.msra.mxu0 0.0
  %202 = vmatprep.subr.mxu0 0.0
  %203 = vmatpush1.msra.mxu0 0.0
  %204 = vmatprep.subr.mxu0 0.0
  %205 = vmatpush1.msra.mxu0 0.0
  %206 = vmatprep.subr.mxu0 0.0
  %207 = vmatpush1.msra.mxu0 0.0
  %208 = vmatprep.subr.mxu0 0.0
  %209 = vmatpush1.msra.mxu0 0.0
  %210 = vmatprep.subr.mxu0 0.0
  %211 = vmatpush1.msra.mxu0 0.0
  %212 = vmatprep.subr.mxu0 0.0
  %213 = vmatpush1.msra.mxu0 0.0
  %214 = vmatprep.subr.mxu0 0.0
  %215 = vmatpush1.msra.mxu0 0.0
  %216 = vmatprep.subr.mxu0 0.0
  %217 = vmatpush1.msra.mxu0 0.0
  %218 = vmatprep.subr.mxu0 0.0
  %219 = vmatpush1.msra.mxu0 0.0
  %220 = vmatprep.subr.mxu0 0.0
  %221 = vmatpush1.msra.mxu0 0.0
  %222 = vmatprep.subr.mxu0 0.0
  %223 = vmatpush1.msra.mxu0 0.0
  %224 = vmatprep.subr.mxu0 0.0
  %225 = vmatpush1.msra.mxu0 0.0
  %226 = vmatprep.subr.mxu0 0.0
  %227 = vmatpush1.msra.mxu0 0.0
  %228 = vmatprep.subr.mxu0 0.0
  %229 = vmatpush1.msra.mxu0 0.0
  %230 = vmatprep.subr.mxu0 0.0
  %231 = vmatpush1.msra.mxu0 0.0
  %232 = vmatprep.subr.mxu0 0.0
  %233 = vmatpush1.msra.mxu0 0.0
  %234 = vmatprep.subr.mxu0 0.0
  %235 = vmatpush1.msra.mxu0 0.0
  %236 = vmatprep.subr.mxu0 0.0
  %237 = vmatpush1.msra.mxu0 0.0
  %238 = vmatprep.subr.mxu0 0.0
  %239 = vmatpush1.msra.mxu0 0.0
  %240 = vmatprep.subr.mxu0 0.0
  %241 = vmatpush1.msra.mxu0 0.0
  %242 = vmatprep.subr.mxu0 0.0
  %243 = vmatpush1.msra.mxu0 0.0
  %244 = vmatprep.subr.mxu0 0.0
  %245 = vmatpush1.msra.mxu0 0.0
  %246 = vmatprep.mubr.f32.mxu0 0.0
  %247 = vmatmul.mubr.f32.gmra.mrb[0].mxu0 %v180
  %v248 = vpop.f32.mrb[0].mxu0
  %v249 = vadd.f32 0.0, %v248
  %v250 = vpop.f32.mrb[0].mxu0
  %251 = vdwg.mxu0
  %v252 = vadd.f32 %v131, %v249
  %v253 = vxor.u32 %v252, 2147483648
  %v254 = vmul.f32 %v253, 1.442695
  %v255 = vpow.pop %v254
  %v256 = vadd.f32 %v255, 1.0
  %v257 = vrcp.pop %v256
  %v258 = vmul.f32 1.0, %v257
  %v259 = vmul.f32 %v258, 2.0
  %v260 = vsub.f32 %v259, 1.0
  %v261 = vmul.f32 %v258, 0.0
  %263 = vrot.lane.b32.xlu0 %v260, 64
  %v264 = vpop.permute.xlu0 %263
  %v266 = vmul.f32 %v258, %v264
  %268 = vrot.lane.b32.xlu0 %v266, 32
  %v269 = vpop.permute.xlu0 %268
  %v271 = vadd.f32 %v261, %v269
  %v272 = vtanh.pop %v271
  %274 = vrot.lane.b32.xlu0 %v272, 64
  %v275 = vpop.permute.xlu0 %274
  %v277 = vmul.f32 %v258, %v275
  %v279 = vlaneseq
  %v280 = vshrl.u32 %v279, 7
  %v281 = vsub.s32 0, %v280
  %v282 = vrot.slane %v177, %v281
  %285 = vrot.lane.b32.xlu0 %v277, 32
  %v286 = vpop.permute.xlu0 %285
  %v287 = vsel %vm178, %v286, 0
  %289 = vmatprep.subr.mxu0 0.0
  %290 = vmatpush1.msra.mxu0 %v173
  %291 = vmatprep.subr.mxu0 0.0
  %292 = vmatpush1.msra.mxu0 %v174
  %293 = vmatprep.subr.mxu0 0.0
  %294 = vmatpush1.msra.mxu0 %v175
  %295 = vmatprep.subr.mxu0 0.0
  %296 = vmatpush1.msra.mxu0 %v176
  %297 = vmatprep.subr.mxu0 0.0
  %298 = vmatpush1.msra.mxu0 0.0
  %299 = vmatprep.subr.mxu0 0.0
  %300 = vmatpush1.msra.mxu0 0.0
  %301 = vmatprep.subr.mxu0 0.0
  %302 = vmatpush1.msra.mxu0 0.0
  %303 = vmatprep.subr.mxu0 0.0
  %304 = vmatpush1.msra.mxu0 0.0
  %305 = vmatprep.subr.mxu0 0.0
  %306 = vmatpush1.msra.mxu0 0.0
  %307 = vmatprep.subr.mxu0 0.0
  %308 = vmatpush1.msra.mxu0 0.0
  %309 = vmatprep.subr.mxu0 0.0
  %310 = vmatpush1.msra.mxu0 0.0
  %311 = vmatprep.subr.mxu0 0.0
  %312 = vmatpush1.msra.mxu0 0.0
  %313 = vmatprep.subr.mxu0 0.0
  %314 = vmatpush1.msra.mxu0 0.0
  %315 = vmatprep.subr.mxu0 0.0
  %316 = vmatpush1.msra.mxu0 0.0
  %317 = vmatprep.subr.mxu0 0.0
  %318 = vmatpush1.msra.mxu0 0.0
  %319 = vmatprep.subr.mxu0 0.0
  %320 = vmatpush1.msra.mxu0 0.0
  %321 = vmatprep.subr.mxu0 0.0
  %322 = vmatpush1.msra.mxu0 0.0
  %323 = vmatprep.subr.mxu0 0.0
  %324 = vmatpush1.msra.mxu0 0.0
  %325 = vmatprep.subr.mxu0 0.0
  %326 = vmatpush1.msra.mxu0 0.0
  %327 = vmatprep.subr.mxu0 0.0
  %328 = vmatpush1.msra.mxu0 0.0
  %329 = vmatprep.subr.mxu0 0.0
  %330 = vmatpush1.msra.mxu0 0.0
  %331 = vmatprep.subr.mxu0 0.0
  %332 = vmatpush1.msra.mxu0 0.0
  %333 = vmatprep.subr.mxu0 0.0
  %334 = vmatpush1.msra.mxu0 0.0
  %335 = vmatprep.subr.mxu0 0.0
  %336 = vmatpush1.msra.mxu0 0.0
  %337 = vmatprep.subr.mxu0 0.0
  %338 = vmatpush1.msra.mxu0 0.0
  %339 = vmatprep.subr.mxu0 0.0
  %340 = vmatpush1.msra.mxu0 0.0
  %341 = vmatprep.subr.mxu0 0.0
  %342 = vmatpush1.msra.mxu0 0.0
  %343 = vmatprep.subr.mxu0 0.0
  %344 = vmatpush1.msra.mxu0 0.0
  %345 = vmatprep.subr.mxu0 0.0
  %346 = vmatpush1.msra.mxu0 0.0
  %347 = vmatprep.subr.mxu0 0.0
  %348 = vmatpush1.msra.mxu0 0.0
  %349 = vmatprep.subr.mxu0 0.0
  %350 = vmatpush1.msra.mxu0 0.0
  %351 = vmatprep.subr.mxu0 0.0
  %352 = vmatpush1.msra.mxu0 0.0
  %353 = vmatprep.mubr.f32.mxu0 0.0
  %354 = vmatmul.mubr.f32.gmra.mrb[0].mxu0 %v287
  %v355 = vpop.f32.mrb[0].mxu0
  %v356 = vadd.f32 %v282, %v355
  %v357 = vpop.f32.mrb[0].mxu0
  %358 = vdwg.mxu0
  %359 = vst [vmem:[%s6] sm:$0xff] %v356
  %360 = vmatprep.subr.mxu0 0.0
  %361 = vmatpush1.msra.mxu0 %v169
  %362 = vmatprep.subr.mxu0 0.0
  %363 = vmatpush1.msra.mxu0 %v170
  %364 = vmatprep.subr.mxu0 0.0
  %365 = vmatpush1.msra.mxu0 %v171
  %366 = vmatprep.subr.mxu0 0.0
  %367 = vmatpush1.msra.mxu0 %v172
  %368 = vmatprep.subr.mxu0 0.0
  %369 = vmatpush1.msra.mxu0 0.0
  %370 = vmatprep.subr.mxu0 0.0
  %371 = vmatpush1.msra.mxu0 0.0
  %372 = vmatprep.subr.mxu0 0.0
  %373 = vmatpush1.msra.mxu0 0.0
  %374 = vmatprep.subr.mxu0 0.0
  %375 = vmatpush1.msra.mxu0 0.0
  %376 = vmatprep.subr.mxu0 0.0
  %377 = vmatpush1.msra.mxu0 0.0
  %378 = vmatprep.subr.mxu0 0.0
  %379 = vmatpush1.msra.mxu0 0.0
  %380 = vmatprep.subr.mxu0 0.0
  %381 = vmatpush1.msra.mxu0 0.0
  %382 = vmatprep.subr.mxu0 0.0
  %383 = vmatpush1.msra.mxu0 0.0
  %384 = vmatprep.subr.mxu0 0.0
  %385 = vmatpush1.msra.mxu0 0.0
  %386 = vmatprep.subr.mxu0 0.0
  %387 = vmatpush1.msra.mxu0 0.0
  %388 = vmatprep.subr.mxu0 0.0
  %389 = vmatpush1.msra.mxu0 0.0
  %390 = vmatprep.subr.mxu0 0.0
  %391 = vmatpush1.msra.mxu0 0.0
  %392 = vmatprep.subr.mxu0 0.0
  %393 = vmatpush1.msra.mxu0 0.0
  %394 = vmatprep.subr.mxu0 0.0
  %395 = vmatpush1.msra.mxu0 0.0
  %396 = vmatprep.subr.mxu0 0.0
  %397 = vmatpush1.msra.mxu0 0.0
  %398 = vmatprep.subr.mxu0 0.0
  %399 = vmatpush1.msra.mxu0 0.0
  %400 = vmatprep.subr.mxu0 0.0
  %401 = vmatpush1.msra.mxu0 0.0
  %402 = vmatprep.subr.mxu0 0.0
  %403 = vmatpush1.msra.mxu0 0.0
  %404 = vmatprep.subr.mxu0 0.0
  %405 = vmatpush1.msra.mxu0 0.0
  %406 = vmatprep.subr.mxu0 0.0
  %407 = vmatpush1.msra.mxu0 0.0
  %408 = vmatprep.subr.mxu0 0.0
  %409 = vmatpush1.msra.mxu0 0.0
  %410 = vmatprep.subr.mxu0 0.0
  %411 = vmatpush1.msra.mxu0 0.0
  %412 = vmatprep.subr.mxu0 0.0
  %413 = vmatpush1.msra.mxu0 0.0
  %414 = vmatprep.subr.mxu0 0.0
  %415 = vmatpush1.msra.mxu0 0.0
  %416 = vmatprep.subr.mxu0 0.0
  %417 = vmatpush1.msra.mxu0 0.0
  %418 = vmatprep.subr.mxu0 0.0
  %419 = vmatpush1.msra.mxu0 0.0
  %420 = vmatprep.subr.mxu0 0.0
  %421 = vmatpush1.msra.mxu0 0.0
  %422 = vmatprep.subr.mxu0 0.0
  %423 = vmatpush1.msra.mxu0 0.0
  %424 = vmatprep.mubr.f32.mxu0 0.0
  %425 = vmatmul.mubr.f32.gmra.mrb[0].mxu0 %v287
  %v426 = vpop.f32.mrb[0].mxu0
  %v427 = vadd.f32 0.0, %v426
  %v428 = vpop.f32.mrb[0].mxu0
  %429 = vdwg.mxu0
  %v430 = vadd.f32 %v136, %v427
  %v431 = vxor.u32 %v430, 2147483648
  %v432 = vmul.f32 %v431, 1.442695
  %v433 = vpow.pop %v432
  %v434 = vadd.f32 %v433, 1.0
  %v435 = vrcp.pop %v434
  %v436 = vmul.f32 1.0, %v435
  %v437 = vmul.f32 %v436, 2.0
  %v438 = vsub.f32 %v437, 1.0
  %v439 = vmul.f32 %v436, %v271
  %441 = vrot.lane.b32.xlu0 %v438, 64
  %v442 = vpop.permute.xlu0 %441
  %v444 = vmul.f32 %v436, %v442
  %446 = vrot.lane.b32.xlu0 %v444, 32
  %v447 = vpop.permute.xlu0 %446
  %v449 = vadd.f32 %v439, %v447
  %v450 = vtanh.pop %v449
  %452 = vrot.lane.b32.xlu0 %v450, 64
  %v453 = vpop.permute.xlu0 %452
  %v455 = vmul.f32 %v436, %v453
  %457 = vrot.lane.b32.xlu0 %v455, 32
  %v458 = vpop.permute.xlu0 %457
  %v459 = vsel %vm178, %v458, 0
  %461 = vmatprep.subr.mxu0 0.0
  %462 = vmatpush1.msra.mxu0 %v173
  %463 = vmatprep.subr.mxu0 0.0
  %464 = vmatpush1.msra.mxu0 %v174
  %465 = vmatprep.subr.mxu0 0.0
  %466 = vmatpush1.msra.mxu0 %v175
  %467 = vmatprep.subr.mxu0 0.0
  %468 = vmatpush1.msra.mxu0 %v176
  %469 = vmatprep.subr.mxu0 0.0
  %470 = vmatpush1.msra.mxu0 0.0
  %471 = vmatprep.subr.mxu0 0.0
  %472 = vmatpush1.msra.mxu0 0.0
  %473 = vmatprep.subr.mxu0 0.0
  %474 = vmatpush1.msra.mxu0 0.0
  %475 = vmatprep.subr.mxu0 0.0
  %476 = vmatpush1.msra.mxu0 0.0
  %477 = vmatprep.subr.mxu0 0.0
  %478 = vmatpush1.msra.mxu0 0.0
  %479 = vmatprep.subr.mxu0 0.0
  %480 = vmatpush1.msra.mxu0 0.0
  %481 = vmatprep.subr.mxu0 0.0
  %482 = vmatpush1.msra.mxu0 0.0
  %483 = vmatprep.subr.mxu0 0.0
  %484 = vmatpush1.msra.mxu0 0.0
  %485 = vmatprep.subr.mxu0 0.0
  %486 = vmatpush1.msra.mxu0 0.0
  %487 = vmatprep.subr.mxu0 0.0
  %488 = vmatpush1.msra.mxu0 0.0
  %489 = vmatprep.subr.mxu0 0.0
  %490 = vmatpush1.msra.mxu0 0.0
  %491 = vmatprep.subr.mxu0 0.0
  %492 = vmatpush1.msra.mxu0 0.0
  %493 = vmatprep.subr.mxu0 0.0
  %494 = vmatpush1.msra.mxu0 0.0
  %495 = vmatprep.subr.mxu0 0.0
  %496 = vmatpush1.msra.mxu0 0.0
  %497 = vmatprep.subr.mxu0 0.0
  %498 = vmatpush1.msra.mxu0 0.0
  %499 = vmatprep.subr.mxu0 0.0
  %500 = vmatpush1.msra.mxu0 0.0
  %501 = vmatprep.subr.mxu0 0.0
  %502 = vmatpush1.msra.mxu0 0.0
  %503 = vmatprep.subr.mxu0 0.0
  %504 = vmatpush1.msra.mxu0 0.0
  %505 = vmatprep.subr.mxu0 0.0
  %506 = vmatpush1.msra.mxu0 0.0
  %507 = vmatprep.subr.mxu0 0.0
  %508 = vmatpush1.msra.mxu0 0.0
  %509 = vmatprep.subr.mxu0 0.0
  %510 = vmatpush1.msra.mxu0 0.0
  %511 = vmatprep.subr.mxu0 0.0
  %512 = vmatpush1.msra.mxu0 0.0
  %513 = vmatprep.subr.mxu0 0.0
  %514 = vmatpush1.msra.mxu0 0.0
  %515 = vmatprep.subr.mxu0 0.0
  %516 = vmatpush1.msra.mxu0 0.0
  %517 = vmatprep.subr.mxu0 0.0
  %518 = vmatpush1.msra.mxu0 0.0
  %519 = vmatprep.subr.mxu0 0.0
  %520 = vmatpush1.msra.mxu0 0.0
  %521 = vmatprep.subr.mxu0 0.0
  %522 = vmatpush1.msra.mxu0 0.0
  %523 = vmatprep.subr.mxu0 0.0
  %524 = vmatpush1.msra.mxu0 0.0
  %525 = vmatprep.mubr.f32.mxu0 0.0
  %526 = vmatmul.mubr.f32.gmra.mrb[0].mxu0 %v459
  %v527 = vpop.f32.mrb[0].mxu0
  %v528 = vadd.f32 %v282, %v527
  %v529 = vpop.f32.mrb[0].mxu0
  %530 = vdwg.mxu0
  %531 = vst [vmem:[%s6 + $0x8] sm:$0xff] %v528
  %532 = vmatprep.subr.mxu0 0.0
  %533 = vmatpush1.msra.mxu0 %v169
  %534 = vmatprep.subr.mxu0 0.0
  %535 = vmatpush1.msra.mxu0 %v170
  %536 = vmatprep.subr.mxu0 0.0
  %537 = vmatpush1.msra.mxu0 %v171
  %538 = vmatprep.subr.mxu0 0.0
  %539 = vmatpush1.msra.mxu0 %v172
  %540 = vmatprep.subr.mxu0 0.0
  %541 = vmatpush1.msra.mxu0 0.0
  %542 = vmatprep.subr.mxu0 0.0
  %543 = vmatpush1.msra.mxu0 0.0
  %544 = vmatprep.subr.mxu0 0.0
  %545 = vmatpush1.msra.mxu0 0.0
  %546 = vmatprep.subr.mxu0 0.0
  %547 = vmatpush1.msra.mxu0 0.0
  %548 = vmatprep.subr.mxu0 0.0
  %549 = vmatpush1.msra.mxu0 0.0
  %550 = vmatprep.subr.mxu0 0.0
  %551 = vmatpush1.msra.mxu0 0.0
  %552 = vmatprep.subr.mxu0 0.0
  %553 = vmatpush1.msra.mxu0 0.0
  %554 = vmatprep.subr.mxu0 0.0
  %555 = vmatpush1.msra.mxu0 0.0
  %556 = vmatprep.subr.mxu0 0.0
  %557 = vmatpush1.msra.mxu0 0.0
  %558 = vmatprep.subr.mxu0 0.0
  %559 = vmatpush1.msra.mxu0 0.0
  %560 = vmatprep.subr.mxu0 0.0
  %561 = vmatpush1.msra.mxu0 0.0
  %562 = vmatprep.subr.mxu0 0.0
  %563 = vmatpush1.msra.mxu0 0.0
  %564 = vmatprep.subr.mxu0 0.0
  %565 = vmatpush1.msra.mxu0 0.0
  %566 = vmatprep.subr.mxu0 0.0
  %567 = vmatpush1.msra.mxu0 0.0
  %568 = vmatprep.subr.mxu0 0.0
  %569 = vmatpush1.msra.mxu0 0.0
  %570 = vmatprep.subr.mxu0 0.0
  %571 = vmatpush1.msra.mxu0 0.0
  %572 = vmatprep.subr.mxu0 0.0
  %573 = vmatpush1.msra.mxu0 0.0
  %574 = vmatprep.subr.mxu0 0.0
  %575 = vmatpush1.msra.mxu0 0.0
  %576 = vmatprep.subr.mxu0 0.0
  %577 = vmatpush1.msra.mxu0 0.0
  %578 = vmatprep.subr.mxu0 0.0
  %579 = vmatpush1.msra.mxu0 0.0
  %580 = vmatprep.subr.mxu0 0.0
  %581 = vmatpush1.msra.mxu0 0.0
  %582 = vmatprep.subr.mxu0 0.0
  %583 = vmatpush1.msra.mxu0 0.0
  %584 = vmatprep.subr.mxu0 0.0
  %585 = vmatpush1.msra.mxu0 0.0
  %586 = vmatprep.subr.mxu0 0.0
  %587 = vmatpush1.msra.mxu0 0.0
  %588 = vmatprep.subr.mxu0 0.0
  %589 = vmatpush1.msra.mxu0 0.0
  %590 = vmatprep.subr.mxu0 0.0
  %591 = vmatpush1.msra.mxu0 0.0
  %592 = vmatprep.subr.mxu0 0.0
  %593 = vmatpush1.msra.mxu0 0.0
  %594 = vmatprep.subr.mxu0 0.0
  %595 = vmatpush1.msra.mxu0 0.0
  %596 = vmatprep.mubr.f32.mxu0 0.0
  %597 = vmatmul.mubr.f32.gmra.mrb[0].mxu0 %v459
  %v598 = vpop.f32.mrb[0].mxu0
  %v599 = vadd.f32 0.0, %v598
  %v600 = vpop.f32.mrb[0].mxu0
  %601 = vdwg.mxu0
  %v602 = vadd.f32 %v141, %v599
  %v603 = vxor.u32 %v602, 2147483648
  %v604 = vmul.f32 %v603, 1.442695
  %v605 = vpow.pop %v604
  %v606 = vadd.f32 %v605, 1.0
  %v607 = vrcp.pop %v606
  %v608 = vmul.f32 1.0, %v607
  %v609 = vmul.f32 %v608, 2.0
  %v610 = vsub.f32 %v609, 1.0
  %v611 = vmul.f32 %v608, %v449
  %613 = vrot.lane.b32.xlu0 %v610, 64
  %v614 = vpop.permute.xlu0 %613
  %v616 = vmul.f32 %v608, %v614
  %618 = vrot.lane.b32.xlu0 %v616, 32
  %v619 = vpop.permute.xlu0 %618
  %v621 = vadd.f32 %v611, %v619
  %v622 = vtanh.pop %v621
  %624 = vrot.lane.b32.xlu0 %v622, 64
  %v625 = vpop.permute.xlu0 %624
  %v627 = vmul.f32 %v608, %v625
  %629 = vrot.lane.b32.xlu0 %v627, 32
  %v630 = vpop.permute.xlu0 %629
  %v631 = vsel %vm178, %v630, 0
  %633 = vmatprep.subr.mxu0 0.0
  %634 = vmatpush1.msra.mxu0 %v173
  %635 = vmatprep.subr.mxu0 0.0
  %636 = vmatpush1.msra.mxu0 %v174
  %637 = vmatprep.subr.mxu0 0.0
  %638 = vmatpush1.msra.mxu0 %v175
  %639 = vmatprep.subr.mxu0 0.0
  %640 = vmatpush1.msra.mxu0 %v176
  %641 = vmatprep.subr.mxu0 0.0
  %642 = vmatpush1.msra.mxu0 0.0
  %643 = vmatprep.subr.mxu0 0.0
  %644 = vmatpush1.msra.mxu0 0.0
  %645 = vmatprep.subr.mxu0 0.0
  %646 = vmatpush1.msra.mxu0 0.0
  %647 = vmatprep.subr.mxu0 0.0
  %648 = vmatpush1.msra.mxu0 0.0
  %649 = vmatprep.subr.mxu0 0.0
  %650 = vmatpush1.msra.mxu0 0.0
  %651 = vmatprep.subr.mxu0 0.0
  %652 = vmatpush1.msra.mxu0 0.0
  %653 = vmatprep.subr.mxu0 0.0
  %654 = vmatpush1.msra.mxu0 0.0
  %655 = vmatprep.subr.mxu0 0.0
  %656 = vmatpush1.msra.mxu0 0.0
  %657 = vmatprep.subr.mxu0 0.0
  %658 = vmatpush1.msra.mxu0 0.0
  %659 = vmatprep.subr.mxu0 0.0
  %660 = vmatpush1.msra.mxu0 0.0
  %661 = vmatprep.subr.mxu0 0.0
  %662 = vmatpush1.msra.mxu0 0.0
  %663 = vmatprep.subr.mxu0 0.0
  %664 = vmatpush1.msra.mxu0 0.0
  %665 = vmatprep.subr.mxu0 0.0
  %666 = vmatpush1.msra.mxu0 0.0
  %667 = vmatprep.subr.mxu0 0.0
  %668 = vmatpush1.msra.mxu0 0.0
  %669 = vmatprep.subr.mxu0 0.0
  %670 = vmatpush1.msra.mxu0 0.0
  %671 = vmatprep.subr.mxu0 0.0
  %672 = vmatpush1.msra.mxu0 0.0
  %673 = vmatprep.subr.mxu0 0.0
  %674 = vmatpush1.msra.mxu0 0.0
  %675 = vmatprep.subr.mxu0 0.0
  %676 = vmatpush1.msra.mxu0 0.0
  %677 = vmatprep.subr.mxu0 0.0
  %678 = vmatpush1.msra.mxu0 0.0
  %679 = vmatprep.subr.mxu0 0.0
  %680 = vmatpush1.msra.mxu0 0.0
  %681 = vmatprep.subr.mxu0 0.0
  %682 = vmatpush1.msra.mxu0 0.0
  %683 = vmatprep.subr.mxu0 0.0
  %684 = vmatpush1.msra.mxu0 0.0
  %685 = vmatprep.subr.mxu0 0.0
  %686 = vmatpush1.msra.mxu0 0.0
  %687 = vmatprep.subr.mxu0 0.0
  %688 = vmatpush1.msra.mxu0 0.0
  %689 = vmatprep.subr.mxu0 0.0
  %690 = vmatpush1.msra.mxu0 0.0
  %691 = vmatprep.subr.mxu0 0.0
  %692 = vmatpush1.msra.mxu0 0.0
  %693 = vmatprep.subr.mxu0 0.0
  %694 = vmatpush1.msra.mxu0 0.0
  %695 = vmatprep.subr.mxu0 0.0
  %696 = vmatpush1.msra.mxu0 0.0
  %697 = vmatprep.mubr.f32.mxu0 0.0
  %698 = vmatmul.mubr.f32.gmra.mrb[0].mxu0 %v631
  %v699 = vpop.f32.mrb[0].mxu0
  %v700 = vadd.f32 %v282, %v699
  %v701 = vpop.f32.mrb[0].mxu0
  %702 = vdwg.mxu0
  %703 = vst [vmem:[%s6 + $0x10] sm:$0xff] %v700
  %704 = vmatprep.subr.mxu0 0.0
  %705 = vmatpush1.msra.mxu0 %v169
  %706 = vmatprep.subr.mxu0 0.0
  %707 = vmatpush1.msra.mxu0 %v170
  %708 = vmatprep.subr.mxu0 0.0
  %709 = vmatpush1.msra.mxu0 %v171
  %710 = vmatprep.subr.mxu0 0.0
  %711 = vmatpush1.msra.mxu0 %v172
  %712 = vmatprep.subr.mxu0 0.0
  %713 = vmatpush1.msra.mxu0 0.0
  %714 = vmatprep.subr.mxu0 0.0
  %715 = vmatpush1.msra.mxu0 0.0
  %716 = vmatprep.subr.mxu0 0.0
  %717 = vmatpush1.msra.mxu0 0.0
  %718 = vmatprep.subr.mxu0 0.0
  %719 = vmatpush1.msra.mxu0 0.0
  %720 = vmatprep.subr.mxu0 0.0
  %721 = vmatpush1.msra.mxu0 0.0
  %722 = vmatprep.subr.mxu0 0.0
  %723 = vmatpush1.msra.mxu0 0.0
  %724 = vmatprep.subr.mxu0 0.0
  %725 = vmatpush1.msra.mxu0 0.0
  %726 = vmatprep.subr.mxu0 0.0
  %727 = vmatpush1.msra.mxu0 0.0
  %728 = vmatprep.subr.mxu0 0.0
  %729 = vmatpush1.msra.mxu0 0.0
  %730 = vmatprep.subr.mxu0 0.0
  %731 = vmatpush1.msra.mxu0 0.0
  %732 = vmatprep.subr.mxu0 0.0
  %733 = vmatpush1.msra.mxu0 0.0
  %734 = vmatprep.subr.mxu0 0.0
  %735 = vmatpush1.msra.mxu0 0.0
  %736 = vmatprep.subr.mxu0 0.0
  %737 = vmatpush1.msra.mxu0 0.0
  %738 = vmatprep.subr.mxu0 0.0
  %739 = vmatpush1.msra.mxu0 0.0
  %740 = vmatprep.subr.mxu0 0.0
  %741 = vmatpush1.msra.mxu0 0.0
  %742 = vmatprep.subr.mxu0 0.0
  %743 = vmatpush1.msra.mxu0 0.0
  %744 = vmatprep.subr.mxu0 0.0
  %745 = vmatpush1.msra.mxu0 0.0
  %746 = vmatprep.subr.mxu0 0.0
  %747 = vmatpush1.msra.mxu0 0.0
  %748 = vmatprep.subr.mxu0 0.0
  %749 = vmatpush1.msra.mxu0 0.0
  %750 = vmatprep.subr.mxu0 0.0
  %751 = vmatpush1.msra.mxu0 0.0
  %752 = vmatprep.subr.mxu0 0.0
  %753 = vmatpush1.msra.mxu0 0.0
  %754 = vmatprep.subr.mxu0 0.0
  %755 = vmatpush1.msra.mxu0 0.0
  %756 = vmatprep.subr.mxu0 0.0
  %757 = vmatpush1.msra.mxu0 0.0
  %758 = vmatprep.subr.mxu0 0.0
  %759 = vmatpush1.msra.mxu0 0.0
  %760 = vmatprep.subr.mxu0 0.0
  %761 = vmatpush1.msra.mxu0 0.0
  %762 = vmatprep.subr.mxu0 0.0
  %763 = vmatpush1.msra.mxu0 0.0
  %764 = vmatprep.subr.mxu0 0.0
  %765 = vmatpush1.msra.mxu0 0.0
  %766 = vmatprep.subr.mxu0 0.0
  %767 = vmatpush1.msra.mxu0 0.0
  %768 = vmatprep.mubr.f32.mxu0 0.0
  %769 = vmatmul.mubr.f32.gmra.mrb[0].mxu0 %v631
  %v770 = vpop.f32.mrb[0].mxu0
  %v771 = vadd.f32 0.0, %v770
  %v772 = vpop.f32.mrb[0].mxu0
  %773 = vdwg.mxu0
  %v774 = vadd.f32 %v146, %v771
  %v775 = vxor.u32 %v774, 2147483648
  %v776 = vmul.f32 %v775, 1.442695
  %v777 = vpow.pop %v776
  %v778 = vadd.f32 %v777, 1.0
  %v779 = vrcp.pop %v778
  %v780 = vmul.f32 1.0, %v779
  %v781 = vmul.f32 %v780, 2.0
  %v782 = vsub.f32 %v781, 1.0
  %v783 = vmul.f32 %v780, %v621
  %785 = vrot.lane.b32.xlu0 %v782, 64
  %v786 = vpop.permute.xlu0 %785
  %v788 = vmul.f32 %v780, %v786
  %790 = vrot.lane.b32.xlu0 %v788, 32
  %v791 = vpop.permute.xlu0 %790
  %v793 = vadd.f32 %v783, %v791
  %v794 = vtanh.pop %v793
  %796 = vrot.lane.b32.xlu0 %v794, 64
  %v797 = vpop.permute.xlu0 %796
  %v799 = vmul.f32 %v780, %v797
  %801 = vrot.lane.b32.xlu0 %v799, 32
  %v802 = vpop.permute.xlu0 %801
  %v803 = vsel %vm178, %v802, 0
  %805 = vmatprep.subr.mxu0 0.0
  %806 = vmatpush1.msra.mxu0 %v173
  %807 = vmatprep.subr.mxu0 0.0
  %808 = vmatpush1.msra.mxu0 %v174
  %809 = vmatprep.subr.mxu0 0.0
  %810 = vmatpush1.msra.mxu0 %v175
  %811 = vmatprep.subr.mxu0 0.0
  %812 = vmatpush1.msra.mxu0 %v176
  %813 = vmatprep.subr.mxu0 0.0
  %814 = vmatpush1.msra.mxu0 0.0
  %815 = vmatprep.subr.mxu0 0.0
  %816 = vmatpush1.msra.mxu0 0.0
  %817 = vmatprep.subr.mxu0 0.0
  %818 = vmatpush1.msra.mxu0 0.0
  %819 = vmatprep.subr.mxu0 0.0
  %820 = vmatpush1.msra.mxu0 0.0
  %821 = vmatprep.subr.mxu0 0.0
  %822 = vmatpush1.msra.mxu0 0.0
  %823 = vmatprep.subr.mxu0 0.0
  %824 = vmatpush1.msra.mxu0 0.0
  %825 = vmatprep.subr.mxu0 0.0
  %826 = vmatpush1.msra.mxu0 0.0
  %827 = vmatprep.subr.mxu0 0.0
  %828 = vmatpush1.msra.mxu0 0.0
  %829 = vmatprep.subr.mxu0 0.0
  %830 = vmatpush1.msra.mxu0 0.0
  %831 = vmatprep.subr.mxu0 0.0
  %832 = vmatpush1.msra.mxu0 0.0
  %833 = vmatprep.subr.mxu0 0.0
  %834 = vmatpush1.msra.mxu0 0.0
  %835 = vmatprep.subr.mxu0 0.0
  %836 = vmatpush1.msra.mxu0 0.0
  %837 = vmatprep.subr.mxu0 0.0
  %838 = vmatpush1.msra.mxu0 0.0
  %839 = vmatprep.subr.mxu0 0.0
  %840 = vmatpush1.msra.mxu0 0.0
  %841 = vmatprep.subr.mxu0 0.0
  %842 = vmatpush1.msra.mxu0 0.0
  %843 = vmatprep.subr.mxu0 0.0
  %844 = vmatpush1.msra.mxu0 0.0
  %845 = vmatprep.subr.mxu0 0.0
  %846 = vmatpush1.msra.mxu0 0.0
  %847 = vmatprep.subr.mxu0 0.0
  %848 = vmatpush1.msra.mxu0 0.0
  %849 = vmatprep.subr.mxu0 0.0
  %850 = vmatpush1.msra.mxu0 0.0
  %851 = vmatprep.subr.mxu0 0.0
  %852 = vmatpush1.msra.mxu0 0.0
  %853 = vmatprep.subr.mxu0 0.0
  %854 = vmatpush1.msra.mxu0 0.0
  %855 = vmatprep.subr.mxu0 0.0
  %856 = vmatpush1.msra.mxu0 0.0
  %857 = vmatprep.subr.mxu0 0.0
  %858 = vmatpush1.msra.mxu0 0.0
  %859 = vmatprep.subr.mxu0 0.0
  %860 = vmatpush1.msra.mxu0 0.0
  %861 = vmatprep.subr.mxu0 0.0
  %862 = vmatpush1.msra.mxu0 0.0
  %863 = vmatprep.subr.mxu0 0.0
  %864 = vmatpush1.msra.mxu0 0.0
  %865 = vmatprep.subr.mxu0 0.0
  %866 = vmatpush1.msra.mxu0 0.0
  %867 = vmatprep.subr.mxu0 0.0
  %868 = vmatpush1.msra.mxu0 0.0
  %869 = vmatprep.mubr.f32.mxu0 0.0
  %870 = vmatmul.mubr.f32.gmra.mrb[0].mxu0 %v803
  %v871 = vpop.f32.mrb[0].mxu0
  %v872 = vadd.f32 %v282, %v871
  %v873 = vpop.f32.mrb[0].mxu0
  %874 = vdwg.mxu0
  %875 = vst [vmem:[%s6 + $0x18] sm:$0xff] %v872
  %876 = vmatprep.subr.mxu0 0.0
  %877 = vmatpush1.msra.mxu0 %v169
  %878 = vmatprep.subr.mxu0 0.0
  %879 = vmatpush1.msra.mxu0 %v170
  %880 = vmatprep.subr.mxu0 0.0
  %881 = vmatpush1.msra.mxu0 %v171
  %882 = vmatprep.subr.mxu0 0.0
  %883 = vmatpush1.msra.mxu0 %v172
  %884 = vmatprep.subr.mxu0 0.0
  %885 = vmatpush1.msra.mxu0 0.0
  %886 = vmatprep.subr.mxu0 0.0
  %887 = vmatpush1.msra.mxu0 0.0
  %888 = vmatprep.subr.mxu0 0.0
  %889 = vmatpush1.msra.mxu0 0.0
  %890 = vmatprep.subr.mxu0 0.0
  %891 = vmatpush1.msra.mxu0 0.0
  %892 = vmatprep.subr.mxu0 0.0
  %893 = vmatpush1.msra.mxu0 0.0
  %894 = vmatprep.subr.mxu0 0.0
  %895 = vmatpush1.msra.mxu0 0.0
  %896 = vmatprep.subr.mxu0 0.0
  %897 = vmatpush1.msra.mxu0 0.0
  %898 = vmatprep.subr.mxu0 0.0
  %899 = vmatpush1.msra.mxu0 0.0
  %900 = vmatprep.subr.mxu0 0.0
  %901 = vmatpush1.msra.mxu0 0.0
  %902 = vmatprep.subr.mxu0 0.0
  %903 = vmatpush1.msra.mxu0 0.0
  %904 = vmatprep.subr.mxu0 0.0
  %905 = vmatpush1.msra.mxu0 0.0
  %906 = vmatprep.subr.mxu0 0.0
  %907 = vmatpush1.msra.mxu0 0.0
  %908 = vmatprep.subr.mxu0 0.0
  %909 = vmatpush1.msra.mxu0 0.0
  %910 = vmatprep.subr.mxu0 0.0
  %911 = vmatpush1.msra.mxu0 0.0
  %912 = vmatprep.subr.mxu0 0.0
  %913 = vmatpush1.msra.mxu0 0.0
  %914 = vmatprep.subr.mxu0 0.0
  %915 = vmatpush1.msra.mxu0 0.0
  %916 = vmatprep.subr.mxu0 0.0
  %917 = vmatpush1.msra.mxu0 0.0
  %918 = vmatprep.subr.mxu0 0.0
  %919 = vmatpush1.msra.mxu0 0.0
  %920 = vmatprep.subr.mxu0 0.0
  %921 = vmatpush1.msra.mxu0 0.0
  %922 = vmatprep.subr.mxu0 0.0
  %923 = vmatpush1.msra.mxu0 0.0
  %924 = vmatprep.subr.mxu0 0.0
  %925 = vmatpush1.msra.mxu0 0.0
  %926 = vmatprep.subr.mxu0 0.0
  %927 = vmatpush1.msra.mxu0 0.0
  %928 = vmatprep.subr.mxu0 0.0
  %929 = vmatpush1.msra.mxu0 0.0
  %930 = vmatprep.subr.mxu0 0.0
  %931 = vmatpush1.msra.mxu0 0.0
  %932 = vmatprep.subr.mxu0 0.0
  %933 = vmatpush1.msra.mxu0 0.0
  %934 = vmatprep.subr.mxu0 0.0
  %935 = vmatpush1.msra.mxu0 0.0
  %936 = vmatprep.subr.mxu0 0.0
  %937 = vmatpush1.msra.mxu0 0.0
  %938 = vmatprep.subr.mxu0 0.0
  %939 = vmatpush1.msra.mxu0 0.0
  %940 = vmatprep.mubr.f32.mxu0 0.0
  %941 = vmatmul.mubr.f32.gmra.mrb[0].mxu0 %v803
  %v942 = vpop.f32.mrb[0].mxu0
  %v943 = vadd.f32 0.0, %v942
  %v944 = vpop.f32.mrb[0].mxu0
  %945 = vdwg.mxu0
  %v946 = vadd.f32 %v151, %v943
  %v947 = vxor.u32 %v946, 2147483648
  %v948 = vmul.f32 %v947, 1.442695
  %v949 = vpow.pop %v948
  %v950 = vadd.f32 %v949, 1.0
  %v951 = vrcp.pop %v950
  %v952 = vmul.f32 1.0, %v951
  %v953 = vmul.f32 %v952, 2.0
  %v954 = vsub.f32 %v953, 1.0
  %v955 = vmul.f32 %v952, %v793
  %957 = vrot.lane.b32.xlu0 %v954, 64
  %v958 = vpop.permute.xlu0 %957
  %v960 = vmul.f32 %v952, %v958
  %962 = vrot.lane.b32.xlu0 %v960, 32
  %v963 = vpop.permute.xlu0 %962
  %v965 = vadd.f32 %v955, %v963
  %v966 = vtanh.pop %v965
  %968 = vrot.lane.b32.xlu0 %v966, 64
  %v969 = vpop.permute.xlu0 %968
  %v971 = vmul.f32 %v952, %v969
  %973 = vrot.lane.b32.xlu0 %v971, 32
  %v974 = vpop.permute.xlu0 %973
  %v975 = vsel %vm178, %v974, 0
  %977 = vmatprep.subr.mxu0 0.0
  %978 = vmatpush1.msra.mxu0 %v173
  %979 = vmatprep.subr.mxu0 0.0
  %980 = vmatpush1.msra.mxu0 %v174
  %981 = vmatprep.subr.mxu0 0.0
  %982 = vmatpush1.msra.mxu0 %v175
  %983 = vmatprep.subr.mxu0 0.0
  %984 = vmatpush1.msra.mxu0 %v176
  %985 = vmatprep.subr.mxu0 0.0
  %986 = vmatpush1.msra.mxu0 0.0
  %987 = vmatprep.subr.mxu0 0.0
  %988 = vmatpush1.msra.mxu0 0.0
  %989 = vmatprep.subr.mxu0 0.0
  %990 = vmatpush1.msra.mxu0 0.0
  %991 = vmatprep.subr.mxu0 0.0
  %992 = vmatpush1.msra.mxu0 0.0
  %993 = vmatprep.subr.mxu0 0.0
  %994 = vmatpush1.msra.mxu0 0.0
  %995 = vmatprep.subr.mxu0 0.0
  %996 = vmatpush1.msra.mxu0 0.0
  %997 = vmatprep.subr.mxu0 0.0
  %998 = vmatpush1.msra.mxu0 0.0
  %999 = vmatprep.subr.mxu0 0.0
  %1000 = vmatpush1.msra.mxu0 0.0
  %1001 = vmatprep.subr.mxu0 0.0
  %1002 = vmatpush1.msra.mxu0 0.0
  %1003 = vmatprep.subr.mxu0 0.0
  %1004 = vmatpush1.msra.mxu0 0.0
  %1005 = vmatprep.subr.mxu0 0.0
  %1006 = vmatpush1.msra.mxu0 0.0
  %1007 = vmatprep.subr.mxu0 0.0
  %1008 = vmatpush1.msra.mxu0 0.0
  %1009 = vmatprep.subr.mxu0 0.0
  %1010 = vmatpush1.msra.mxu0 0.0
  %1011 = vmatprep.subr.mxu0 0.0
  %1012 = vmatpush1.msra.mxu0 0.0
  %1013 = vmatprep.subr.mxu0 0.0
  %1014 = vmatpush1.msra.mxu0 0.0
  %1015 = vmatprep.subr.mxu0 0.0
  %1016 = vmatpush1.msra.mxu0 0.0
  %1017 = vmatprep.subr.mxu0 0.0
  %1018 = vmatpush1.msra.mxu0 0.0
  %1019 = vmatprep.subr.mxu0 0.0
  %1020 = vmatpush1.msra.mxu0 0.0
  %1021 = vmatprep.subr.mxu0 0.0
  %1022 = vmatpush1.msra.mxu0 0.0
  %1023 = vmatprep.subr.mxu0 0.0
  %1024 = vmatpush1.msra.mxu0 0.0
  %1025 = vmatprep.subr.mxu0 0.0
  %1026 = vmatpush1.msra.mxu0 0.0
  %1027 = vmatprep.subr.mxu0 0.0
  %1028 = vmatpush1.msra.mxu0 0.0
  %1029 = vmatprep.subr.mxu0 0.0
  %1030 = vmatpush1.msra.mxu0 0.0
  %1031 = vmatprep.subr.mxu0 0.0
  %1032 = vmatpush1.msra.mxu0 0.0
  %1033 = vmatprep.subr.mxu0 0.0
  %1034 = vmatpush1.msra.mxu0 0.0
  %1035 = vmatprep.subr.mxu0 0.0
  %1036 = vmatpush1.msra.mxu0 0.0
  %1037 = vmatprep.subr.mxu0 0.0
  %1038 = vmatpush1.msra.mxu0 0.0
  %1039 = vmatprep.subr.mxu0 0.0
  %1040 = vmatpush1.msra.mxu0 0.0
  %1041 = vmatprep.mubr.f32.mxu0 0.0
  %1042 = vmatmul.mubr.f32.gmra.mrb[0].mxu0 %v975
  %v1043 = vpop.f32.mrb[0].mxu0
  %v1044 = vadd.f32 %v282, %v1043
  %v1045 = vpop.f32.mrb[0].mxu0
  %1046 = vdwg.mxu0
  %1047 = vst [vmem:[%s6 + $0x20] sm:$0xff] %v1044
  %1048 = vmatprep.subr.mxu0 0.0
  %1049 = vmatpush1.msra.mxu0 %v169
  %1050 = vmatprep.subr.mxu0 0.0
  %1051 = vmatpush1.msra.mxu0 %v170
  %1052 = vmatprep.subr.mxu0 0.0
  %1053 = vmatpush1.msra.mxu0 %v171
  %1054 = vmatprep.subr.mxu0 0.0
  %1055 = vmatpush1.msra.mxu0 %v172
  %1056 = vmatprep.subr.mxu0 0.0
  %1057 = vmatpush1.msra.mxu0 0.0
  %1058 = vmatprep.subr.mxu0 0.0
  %1059 = vmatpush1.msra.mxu0 0.0
  %1060 = vmatprep.subr.mxu0 0.0
  %1061 = vmatpush1.msra.mxu0 0.0
  %1062 = vmatprep.subr.mxu0 0.0
  %1063 = vmatpush1.msra.mxu0 0.0
  %1064 = vmatprep.subr.mxu0 0.0
  %1065 = vmatpush1.msra.mxu0 0.0
  %1066 = vmatprep.subr.mxu0 0.0
  %1067 = vmatpush1.msra.mxu0 0.0
  %1068 = vmatprep.subr.mxu0 0.0
  %1069 = vmatpush1.msra.mxu0 0.0
  %1070 = vmatprep.subr.mxu0 0.0
  %1071 = vmatpush1.msra.mxu0 0.0
  %1072 = vmatprep.subr.mxu0 0.0
  %1073 = vmatpush1.msra.mxu0 0.0
  %1074 = vmatprep.subr.mxu0 0.0
  %1075 = vmatpush1.msra.mxu0 0.0
  %1076 = vmatprep.subr.mxu0 0.0
  %1077 = vmatpush1.msra.mxu0 0.0
  %1078 = vmatprep.subr.mxu0 0.0
  %1079 = vmatpush1.msra.mxu0 0.0
  %1080 = vmatprep.subr.mxu0 0.0
  %1081 = vmatpush1.msra.mxu0 0.0
  %1082 = vmatprep.subr.mxu0 0.0
  %1083 = vmatpush1.msra.mxu0 0.0
  %1084 = vmatprep.subr.mxu0 0.0
  %1085 = vmatpush1.msra.mxu0 0.0
  %1086 = vmatprep.subr.mxu0 0.0
  %1087 = vmatpush1.msra.mxu0 0.0
  %1088 = vmatprep.subr.mxu0 0.0
  %1089 = vmatpush1.msra.mxu0 0.0
  %1090 = vmatprep.subr.mxu0 0.0
  %1091 = vmatpush1.msra.mxu0 0.0
  %1092 = vmatprep.subr.mxu0 0.0
  %1093 = vmatpush1.msra.mxu0 0.0
  %1094 = vmatprep.subr.mxu0 0.0
  %1095 = vmatpush1.msra.mxu0 0.0
  %1096 = vmatprep.subr.mxu0 0.0
  %1097 = vmatpush1.msra.mxu0 0.0
  %1098 = vmatprep.subr.mxu0 0.0
  %1099 = vmatpush1.msra.mxu0 0.0
  %1100 = vmatprep.subr.mxu0 0.0
  %1101 = vmatpush1.msra.mxu0 0.0
  %1102 = vmatprep.subr.mxu0 0.0
  %1103 = vmatpush1.msra.mxu0 0.0
  %1104 = vmatprep.subr.mxu0 0.0
  %1105 = vmatpush1.msra.mxu0 0.0
  %1106 = vmatprep.subr.mxu0 0.0
  %1107 = vmatpush1.msra.mxu0 0.0
  %1108 = vmatprep.subr.mxu0 0.0
  %1109 = vmatpush1.msra.mxu0 0.0
  %1110 = vmatprep.subr.mxu0 0.0
  %1111 = vmatpush1.msra.mxu0 0.0
  %1112 = vmatprep.mubr.f32.mxu0 0.0
  %1113 = vmatmul.mubr.f32.gmra.mrb[0].mxu0 %v975
  %v1114 = vpop.f32.mrb[0].mxu0
  %v1115 = vadd.f32 0.0, %v1114
  %v1116 = vpop.f32.mrb[0].mxu0
  %1117 = vdwg.mxu0
  %v1118 = vadd.f32 %v156, %v1115
  %v1119 = vxor.u32 %v1118, 2147483648
  %v1120 = vmul.f32 %v1119, 1.442695
  %v1121 = vpow.pop %v1120
  %v1122 = vadd.f32 %v1121, 1.0
  %v1123 = vrcp.pop %v1122
  %v1124 = vmul.f32 1.0, %v1123
  %v1125 = vmul.f32 %v1124, 2.0
  %v1126 = vsub.f32 %v1125, 1.0
  %v1127 = vmul.f32 %v1124, %v965
  %1129 = vrot.lane.b32.xlu0 %v1126, 64
  %v1130 = vpop.permute.xlu0 %1129
  %v1132 = vmul.f32 %v1124, %v1130
  %1134 = vrot.lane.b32.xlu0 %v1132, 32
  %v1135 = vpop.permute.xlu0 %1134
  %v1137 = vadd.f32 %v1127, %v1135
  %v1138 = vtanh.pop %v1137
  %1140 = vrot.lane.b32.xlu0 %v1138, 64
  %v1141 = vpop.permute.xlu0 %1140
  %v1143 = vmul.f32 %v1124, %v1141
  %1145 = vrot.lane.b32.xlu0 %v1143, 32
  %v1146 = vpop.permute.xlu0 %1145
  %v1147 = vsel %vm178, %v1146, 0
  %1149 = vmatprep.subr.mxu0 0.0
  %1150 = vmatpush1.msra.mxu0 %v173
  %1151 = vmatprep.subr.mxu0 0.0
  %1152 = vmatpush1.msra.mxu0 %v174
  %1153 = vmatprep.subr.mxu0 0.0
  %1154 = vmatpush1.msra.mxu0 %v175
  %1155 = vmatprep.subr.mxu0 0.0
  %1156 = vmatpush1.msra.mxu0 %v176
  %1157 = vmatprep.subr.mxu0 0.0
  %1158 = vmatpush1.msra.mxu0 0.0
  %1159 = vmatprep.subr.mxu0 0.0
  %1160 = vmatpush1.msra.mxu0 0.0
  %1161 = vmatprep.subr.mxu0 0.0
  %1162 = vmatpush1.msra.mxu0 0.0
  %1163 = vmatprep.subr.mxu0 0.0
  %1164 = vmatpush1.msra.mxu0 0.0
  %1165 = vmatprep.subr.mxu0 0.0
  %1166 = vmatpush1.msra.mxu0 0.0
  %1167 = vmatprep.subr.mxu0 0.0
  %1168 = vmatpush1.msra.mxu0 0.0
  %1169 = vmatprep.subr.mxu0 0.0
  %1170 = vmatpush1.msra.mxu0 0.0
  %1171 = vmatprep.subr.mxu0 0.0
  %1172 = vmatpush1.msra.mxu0 0.0
  %1173 = vmatprep.subr.mxu0 0.0
  %1174 = vmatpush1.msra.mxu0 0.0
  %1175 = vmatprep.subr.mxu0 0.0
  %1176 = vmatpush1.msra.mxu0 0.0
  %1177 = vmatprep.subr.mxu0 0.0
  %1178 = vmatpush1.msra.mxu0 0.0
  %1179 = vmatprep.subr.mxu0 0.0
  %1180 = vmatpush1.msra.mxu0 0.0
  %1181 = vmatprep.subr.mxu0 0.0
  %1182 = vmatpush1.msra.mxu0 0.0
  %1183 = vmatprep.subr.mxu0 0.0
  %1184 = vmatpush1.msra.mxu0 0.0
  %1185 = vmatprep.subr.mxu0 0.0
  %1186 = vmatpush1.msra.mxu0 0.0
  %1187 = vmatprep.subr.mxu0 0.0
  %1188 = vmatpush1.msra.mxu0 0.0
  %1189 = vmatprep.subr.mxu0 0.0
  %1190 = vmatpush1.msra.mxu0 0.0
  %1191 = vmatprep.subr.mxu0 0.0
  %1192 = vmatpush1.msra.mxu0 0.0
  %1193 = vmatprep.subr.mxu0 0.0
  %1194 = vmatpush1.msra.mxu0 0.0
  %1195 = vmatprep.subr.mxu0 0.0
  %1196 = vmatpush1.msra.mxu0 0.0
  %1197 = vmatprep.subr.mxu0 0.0
  %1198 = vmatpush1.msra.mxu0 0.0
  %1199 = vmatprep.subr.mxu0 0.0
  %1200 = vmatpush1.msra.mxu0 0.0
  %1201 = vmatprep.subr.mxu0 0.0
  %1202 = vmatpush1.msra.mxu0 0.0
  %1203 = vmatprep.subr.mxu0 0.0
  %1204 = vmatpush1.msra.mxu0 0.0
  %1205 = vmatprep.subr.mxu0 0.0
  %1206 = vmatpush1.msra.mxu0 0.0
  %1207 = vmatprep.subr.mxu0 0.0
  %1208 = vmatpush1.msra.mxu0 0.0
  %1209 = vmatprep.subr.mxu0 0.0
  %1210 = vmatpush1.msra.mxu0 0.0
  %1211 = vmatprep.subr.mxu0 0.0
  %1212 = vmatpush1.msra.mxu0 0.0
  %1213 = vmatprep.mubr.f32.mxu0 0.0
  %1214 = vmatmul.mubr.f32.gmra.mrb[0].mxu0 %v1147
  %v1215 = vpop.f32.mrb[0].mxu0
  %v1216 = vadd.f32 %v282, %v1215
  %v1217 = vpop.f32.mrb[0].mxu0
  %1218 = vdwg.mxu0
  %1219 = vst [vmem:[%s6 + $0x28] sm:$0xff] %v1216
  %1220 = vmatprep.subr.mxu0 0.0
  %1221 = vmatpush1.msra.mxu0 %v169
  %1222 = vmatprep.subr.mxu0 0.0
  %1223 = vmatpush1.msra.mxu0 %v170
  %1224 = vmatprep.subr.mxu0 0.0
  %1225 = vmatpush1.msra.mxu0 %v171
  %1226 = vmatprep.subr.mxu0 0.0
  %1227 = vmatpush1.msra.mxu0 %v172
  %1228 = vmatprep.subr.mxu0 0.0
  %1229 = vmatpush1.msra.mxu0 0.0
  %1230 = vmatprep.subr.mxu0 0.0
  %1231 = vmatpush1.msra.mxu0 0.0
  %1232 = vmatprep.subr.mxu0 0.0
  %1233 = vmatpush1.msra.mxu0 0.0
  %1234 = vmatprep.subr.mxu0 0.0
  %1235 = vmatpush1.msra.mxu0 0.0
  %1236 = vmatprep.subr.mxu0 0.0
  %1237 = vmatpush1.msra.mxu0 0.0
  %1238 = vmatprep.subr.mxu0 0.0
  %1239 = vmatpush1.msra.mxu0 0.0
  %1240 = vmatprep.subr.mxu0 0.0
  %1241 = vmatpush1.msra.mxu0 0.0
  %1242 = vmatprep.subr.mxu0 0.0
  %1243 = vmatpush1.msra.mxu0 0.0
  %1244 = vmatprep.subr.mxu0 0.0
  %1245 = vmatpush1.msra.mxu0 0.0
  %1246 = vmatprep.subr.mxu0 0.0
  %1247 = vmatpush1.msra.mxu0 0.0
  %1248 = vmatprep.subr.mxu0 0.0
  %1249 = vmatpush1.msra.mxu0 0.0
  %1250 = vmatprep.subr.mxu0 0.0
  %1251 = vmatpush1.msra.mxu0 0.0
  %1252 = vmatprep.subr.mxu0 0.0
  %1253 = vmatpush1.msra.mxu0 0.0
  %1254 = vmatprep.subr.mxu0 0.0
  %1255 = vmatpush1.msra.mxu0 0.0
  %1256 = vmatprep.subr.mxu0 0.0
  %1257 = vmatpush1.msra.mxu0 0.0
  %1258 = vmatprep.subr.mxu0 0.0
  %1259 = vmatpush1.msra.mxu0 0.0
  %1260 = vmatprep.subr.mxu0 0.0
  %1261 = vmatpush1.msra.mxu0 0.0
  %1262 = vmatprep.subr.mxu0 0.0
  %1263 = vmatpush1.msra.mxu0 0.0
  %1264 = vmatprep.subr.mxu0 0.0
  %1265 = vmatpush1.msra.mxu0 0.0
  %1266 = vmatprep.subr.mxu0 0.0
  %1267 = vmatpush1.msra.mxu0 0.0
  %1268 = vmatprep.subr.mxu0 0.0
  %1269 = vmatpush1.msra.mxu0 0.0
  %1270 = vmatprep.subr.mxu0 0.0
  %1271 = vmatpush1.msra.mxu0 0.0
  %1272 = vmatprep.subr.mxu0 0.0
  %1273 = vmatpush1.msra.mxu0 0.0
  %1274 = vmatprep.subr.mxu0 0.0
  %1275 = vmatpush1.msra.mxu0 0.0
  %1276 = vmatprep.subr.mxu0 0.0
  %1277 = vmatpush1.msra.mxu0 0.0
  %1278 = vmatprep.subr.mxu0 0.0
  %1279 = vmatpush1.msra.mxu0 0.0
  %1280 = vmatprep.subr.mxu0 0.0
  %1281 = vmatpush1.msra.mxu0 0.0
  %1282 = vmatprep.subr.mxu0 0.0
  %1283 = vmatpush1.msra.mxu0 0.0
  %1284 = vmatprep.mubr.f32.mxu0 0.0
  %1285 = vmatmul.mubr.f32.gmra.mrb[0].mxu0 %v1147
  %v1286 = vpop.f32.mrb[0].mxu0
  %v1287 = vadd.f32 0.0, %v1286
  %v1288 = vpop.f32.mrb[0].mxu0
  %1289 = vdwg.mxu0
  %v1290 = vadd.f32 %v161, %v1287
  %v1291 = vxor.u32 %v1290, 2147483648
  %v1292 = vmul.f32 %v1291, 1.442695
  %v1293 = vpow.pop %v1292
  %v1294 = vadd.f32 %v1293, 1.0
  %v1295 = vrcp.pop %v1294
  %v1296 = vmul.f32 1.0, %v1295
  %v1297 = vmul.f32 %v1296, 2.0
  %v1298 = vsub.f32 %v1297, 1.0
  %v1299 = vmul.f32 %v1296, %v1137
  %1301 = vrot.lane.b32.xlu0 %v1298, 64
  %v1302 = vpop.permute.xlu0 %1301
  %v1304 = vmul.f32 %v1296, %v1302
  %1306 = vrot.lane.b32.xlu0 %v1304, 32
  %v1307 = vpop.permute.xlu0 %1306
  %v1309 = vadd.f32 %v1299, %v1307
  %v1310 = vtanh.pop %v1309
  %1312 = vrot.lane.b32.xlu0 %v1310, 64
  %v1313 = vpop.permute.xlu0 %1312
  %v1315 = vmul.f32 %v1296, %v1313
  %1317 = vrot.lane.b32.xlu0 %v1315, 32
  %v1318 = vpop.permute.xlu0 %1317
  %v1319 = vsel %vm178, %v1318, 0
  %1321 = vmatprep.subr.mxu0 0.0
  %1322 = vmatpush1.msra.mxu0 %v173
  %1323 = vmatprep.subr.mxu0 0.0
  %1324 = vmatpush1.msra.mxu0 %v174
  %1325 = vmatprep.subr.mxu0 0.0
  %1326 = vmatpush1.msra.mxu0 %v175
  %1327 = vmatprep.subr.mxu0 0.0
  %1328 = vmatpush1.msra.mxu0 %v176
  %1329 = vmatprep.subr.mxu0 0.0
  %1330 = vmatpush1.msra.mxu0 0.0
  %1331 = vmatprep.subr.mxu0 0.0
  %1332 = vmatpush1.msra.mxu0 0.0
  %1333 = vmatprep.subr.mxu0 0.0
  %1334 = vmatpush1.msra.mxu0 0.0
  %1335 = vmatprep.subr.mxu0 0.0
  %1336 = vmatpush1.msra.mxu0 0.0
  %1337 = vmatprep.subr.mxu0 0.0
  %1338 = vmatpush1.msra.mxu0 0.0
  %1339 = vmatprep.subr.mxu0 0.0
  %1340 = vmatpush1.msra.mxu0 0.0
  %1341 = vmatprep.subr.mxu0 0.0
  %1342 = vmatpush1.msra.mxu0 0.0
  %1343 = vmatprep.subr.mxu0 0.0
  %1344 = vmatpush1.msra.mxu0 0.0
  %1345 = vmatprep.subr.mxu0 0.0
  %1346 = vmatpush1.msra.mxu0 0.0
  %1347 = vmatprep.subr.mxu0 0.0
  %1348 = vmatpush1.msra.mxu0 0.0
  %1349 = vmatprep.subr.mxu0 0.0
  %1350 = vmatpush1.msra.mxu0 0.0
  %1351 = vmatprep.subr.mxu0 0.0
  %1352 = vmatpush1.msra.mxu0 0.0
  %1353 = vmatprep.subr.mxu0 0.0
  %1354 = vmatpush1.msra.mxu0 0.0
  %1355 = vmatprep.subr.mxu0 0.0
  %1356 = vmatpush1.msra.mxu0 0.0
  %1357 = vmatprep.subr.mxu0 0.0
  %1358 = vmatpush1.msra.mxu0 0.0
  %1359 = vmatprep.subr.mxu0 0.0
  %1360 = vmatpush1.msra.mxu0 0.0
  %1361 = vmatprep.subr.mxu0 0.0
  %1362 = vmatpush1.msra.mxu0 0.0
  %1363 = vmatprep.subr.mxu0 0.0
  %1364 = vmatpush1.msra.mxu0 0.0
  %1365 = vmatprep.subr.mxu0 0.0
  %1366 = vmatpush1.msra.mxu0 0.0
  %1367 = vmatprep.subr.mxu0 0.0
  %1368 = vmatpush1.msra.mxu0 0.0
  %1369 = vmatprep.subr.mxu0 0.0
  %1370 = vmatpush1.msra.mxu0 0.0
  %1371 = vmatprep.subr.mxu0 0.0
  %1372 = vmatpush1.msra.mxu0 0.0
  %1373 = vmatprep.subr.mxu0 0.0
  %1374 = vmatpush1.msra.mxu0 0.0
  %1375 = vmatprep.subr.mxu0 0.0
  %1376 = vmatpush1.msra.mxu0 0.0
  %1377 = vmatprep.subr.mxu0 0.0
  %1378 = vmatpush1.msra.mxu0 0.0
  %1379 = vmatprep.subr.mxu0 0.0
  %1380 = vmatpush1.msra.mxu0 0.0
  %1381 = vmatprep.subr.mxu0 0.0
  %1382 = vmatpush1.msra.mxu0 0.0
  %1383 = vmatprep.subr.mxu0 0.0
  %1384 = vmatpush1.msra.mxu0 0.0
  %1385 = vmatprep.mubr.f32.mxu0 0.0
  %1386 = vmatmul.mubr.f32.gmra.mrb[0].mxu0 %v1319
  %v1387 = vpop.f32.mrb[0].mxu0
  %v1388 = vadd.f32 %v282, %v1387
  %v1389 = vpop.f32.mrb[0].mxu0
  %1390 = vdwg.mxu0
  %1391 = vst [vmem:[%s6 + $0x30] sm:$0xff] %v1388
  %1392 = vmatprep.subr.mxu0 0.0
  %1393 = vmatpush1.msra.mxu0 %v169
  %1394 = vmatprep.subr.mxu0 0.0
  %1395 = vmatpush1.msra.mxu0 %v170
  %1396 = vmatprep.subr.mxu0 0.0
  %1397 = vmatpush1.msra.mxu0 %v171
  %1398 = vmatprep.subr.mxu0 0.0
  %1399 = vmatpush1.msra.mxu0 %v172
  %1400 = vmatprep.subr.mxu0 0.0
  %1401 = vmatpush1.msra.mxu0 0.0
  %1402 = vmatprep.subr.mxu0 0.0
  %1403 = vmatpush1.msra.mxu0 0.0
  %1404 = vmatprep.subr.mxu0 0.0
  %1405 = vmatpush1.msra.mxu0 0.0
  %1406 = vmatprep.subr.mxu0 0.0
  %1407 = vmatpush1.msra.mxu0 0.0
  %1408 = vmatprep.subr.mxu0 0.0
  %1409 = vmatpush1.msra.mxu0 0.0
  %1410 = vmatprep.subr.mxu0 0.0
  %1411 = vmatpush1.msra.mxu0 0.0
  %1412 = vmatprep.subr.mxu0 0.0
  %1413 = vmatpush1.msra.mxu0 0.0
  %1414 = vmatprep.subr.mxu0 0.0
  %1415 = vmatpush1.msra.mxu0 0.0
  %1416 = vmatprep.subr.mxu0 0.0
  %1417 = vmatpush1.msra.mxu0 0.0
  %1418 = vmatprep.subr.mxu0 0.0
  %1419 = vmatpush1.msra.mxu0 0.0
  %1420 = vmatprep.subr.mxu0 0.0
  %1421 = vmatpush1.msra.mxu0 0.0
  %1422 = vmatprep.subr.mxu0 0.0
  %1423 = vmatpush1.msra.mxu0 0.0
  %1424 = vmatprep.subr.mxu0 0.0
  %1425 = vmatpush1.msra.mxu0 0.0
  %1426 = vmatprep.subr.mxu0 0.0
  %1427 = vmatpush1.msra.mxu0 0.0
  %1428 = vmatprep.subr.mxu0 0.0
  %1429 = vmatpush1.msra.mxu0 0.0
  %1430 = vmatprep.subr.mxu0 0.0
  %1431 = vmatpush1.msra.mxu0 0.0
  %1432 = vmatprep.subr.mxu0 0.0
  %1433 = vmatpush1.msra.mxu0 0.0
  %1434 = vmatprep.subr.mxu0 0.0
  %1435 = vmatpush1.msra.mxu0 0.0
  %1436 = vmatprep.subr.mxu0 0.0
  %1437 = vmatpush1.msra.mxu0 0.0
  %1438 = vmatprep.subr.mxu0 0.0
  %1439 = vmatpush1.msra.mxu0 0.0
  %1440 = vmatprep.subr.mxu0 0.0
  %1441 = vmatpush1.msra.mxu0 0.0
  %1442 = vmatprep.subr.mxu0 0.0
  %1443 = vmatpush1.msra.mxu0 0.0
  %1444 = vmatprep.subr.mxu0 0.0
  %1445 = vmatpush1.msra.mxu0 0.0
  %1446 = vmatprep.subr.mxu0 0.0
  %1447 = vmatpush1.msra.mxu0 0.0
  %1448 = vmatprep.subr.mxu0 0.0
  %1449 = vmatpush1.msra.mxu0 0.0
  %1450 = vmatprep.subr.mxu0 0.0
  %1451 = vmatpush1.msra.mxu0 0.0
  %1452 = vmatprep.subr.mxu0 0.0
  %1453 = vmatpush1.msra.mxu0 0.0
  %1454 = vmatprep.subr.mxu0 0.0
  %1455 = vmatpush1.msra.mxu0 0.0
  %1456 = vmatprep.mubr.f32.mxu0 0.0
  %1457 = vmatmul.mubr.f32.gmra.mrb[0].mxu0 %v1319
  %v1458 = vpop.f32.mrb[0].mxu0
  %v1459 = vadd.f32 0.0, %v1458
  %v1460 = vpop.f32.mrb[0].mxu0
  %1461 = vdwg.mxu0
  %v1462 = vadd.f32 %v166, %v1459
  %v1463 = vxor.u32 %v1462, 2147483648
  %v1464 = vmul.f32 %v1463, 1.442695
  %v1465 = vpow.pop %v1464
  %v1466 = vadd.f32 %v1465, 1.0
  %v1467 = vrcp.pop %v1466
  %v1468 = vmul.f32 1.0, %v1467
  %v1469 = vmul.f32 %v1468, 2.0
  %v1470 = vsub.f32 %v1469, 1.0
  %v1471 = vmul.f32 %v1468, %v1309
  %1473 = vrot.lane.b32.xlu0 %v1470, 64
  %v1474 = vpop.permute.xlu0 %1473
  %v1476 = vmul.f32 %v1468, %v1474
  %1478 = vrot.lane.b32.xlu0 %v1476, 32
  %v1479 = vpop.permute.xlu0 %1478
  %v1481 = vadd.f32 %v1471, %v1479
  %v1482 = vtanh.pop %v1481
  %1484 = vrot.lane.b32.xlu0 %v1482, 64
  %v1485 = vpop.permute.xlu0 %1484
  %v1487 = vmul.f32 %v1468, %v1485
  %1489 = vrot.lane.b32.xlu0 %v1487, 32
  %v1490 = vpop.permute.xlu0 %1489
  %v1491 = vsel %vm178, %v1490, 0
  %1493 = vmatprep.subr.mxu0 0.0
  %1494 = vmatpush1.msra.mxu0 %v173
  %1495 = vmatprep.subr.mxu0 0.0
  %1496 = vmatpush1.msra.mxu0 %v174
  %1497 = vmatprep.subr.mxu0 0.0
  %1498 = vmatpush1.msra.mxu0 %v175
  %1499 = vmatprep.subr.mxu0 0.0
  %1500 = vmatpush1.msra.mxu0 %v176
  %1501 = vmatprep.subr.mxu0 0.0
  %1502 = vmatpush1.msra.mxu0 0.0
  %1503 = vmatprep.subr.mxu0 0.0
  %1504 = vmatpush1.msra.mxu0 0.0
  %1505 = vmatprep.subr.mxu0 0.0
  %1506 = vmatpush1.msra.mxu0 0.0
  %1507 = vmatprep.subr.mxu0 0.0
  %1508 = vmatpush1.msra.mxu0 0.0
  %1509 = vmatprep.subr.mxu0 0.0
  %1510 = vmatpush1.msra.mxu0 0.0
  %1511 = vmatprep.subr.mxu0 0.0
  %1512 = vmatpush1.msra.mxu0 0.0
  %1513 = vmatprep.subr.mxu0 0.0
  %1514 = vmatpush1.msra.mxu0 0.0
  %1515 = vmatprep.subr.mxu0 0.0
  %1516 = vmatpush1.msra.mxu0 0.0
  %1517 = vmatprep.subr.mxu0 0.0
  %1518 = vmatpush1.msra.mxu0 0.0
  %1519 = vmatprep.subr.mxu0 0.0
  %1520 = vmatpush1.msra.mxu0 0.0
  %1521 = vmatprep.subr.mxu0 0.0
  %1522 = vmatpush1.msra.mxu0 0.0
  %1523 = vmatprep.subr.mxu0 0.0
  %1524 = vmatpush1.msra.mxu0 0.0
  %1525 = vmatprep.subr.mxu0 0.0
  %1526 = vmatpush1.msra.mxu0 0.0
  %1527 = vmatprep.subr.mxu0 0.0
  %1528 = vmatpush1.msra.mxu0 0.0
  %1529 = vmatprep.subr.mxu0 0.0
  %1530 = vmatpush1.msra.mxu0 0.0
  %1531 = vmatprep.subr.mxu0 0.0
  %1532 = vmatpush1.msra.mxu0 0.0
  %1533 = vmatprep.subr.mxu0 0.0
  %1534 = vmatpush1.msra.mxu0 0.0
  %1535 = vmatprep.subr.mxu0 0.0
  %1536 = vmatpush1.msra.mxu0 0.0
  %1537 = vmatprep.subr.mxu0 0.0
  %1538 = vmatpush1.msra.mxu0 0.0
  %1539 = vmatprep.subr.mxu0 0.0
  %1540 = vmatpush1.msra.mxu0 0.0
  %1541 = vmatprep.subr.mxu0 0.0
  %1542 = vmatpush1.msra.mxu0 0.0
  %1543 = vmatprep.subr.mxu0 0.0
  %1544 = vmatpush1.msra.mxu0 0.0
  %1545 = vmatprep.subr.mxu0 0.0
  %1546 = vmatpush1.msra.mxu0 0.0
  %1547 = vmatprep.subr.mxu0 0.0
  %1548 = vmatpush1.msra.mxu0 0.0
  %1549 = vmatprep.subr.mxu0 0.0
  %1550 = vmatpush1.msra.mxu0 0.0
  %1551 = vmatprep.subr.mxu0 0.0
  %1552 = vmatpush1.msra.mxu0 0.0
  %1553 = vmatprep.subr.mxu0 0.0
  %1554 = vmatpush1.msra.mxu0 0.0
  %1555 = vmatprep.subr.mxu0 0.0
  %1556 = vmatpush1.msra.mxu0 0.0
  %1557 = vmatprep.mubr.f32.mxu0 0.0
  %1558 = vmatmul.mubr.f32.gmra.mrb[0].mxu0 %v1491
  %v1559 = vpop.f32.mrb[0].mxu0
  %v1560 = vadd.f32 %v282, %v1559
  %v1561 = vpop.f32.mrb[0].mxu0
  %1562 = vdwg.mxu0
  %1563 = vst [vmem:[%s6 + $0x38] sm:$0xff] %v1560
  // Predicated region
  $region26: #{vanilla_rnn_forward.1} parent=0 // pred_check
    _
  $region27: #{vanilla_rnn_forward.1} parent=0 // pred_check_branch
    %1565 = sbr.rel (0) target = $region29
  $region28: #{vanilla_rnn_forward.1} parent=0 // pred_region
    _
  $region29: #{vanilla_rnn_forward.1} parent=0 // pred_fallthru
    _
  // Predicated region
  $region30: #{vanilla_rnn_forward.1} parent=0 // pred_check
    _
  $region31: #{vanilla_rnn_forward.1} parent=0 // pred_check_branch
    %1567 = sbr.rel (0) target = $region33
  $region32: #{vanilla_rnn_forward.1} parent=0 // pred_region
    _
  $region33: #{vanilla_rnn_forward.1} parent=0 // pred_fallthru
    _

</llo_original>
